<compile_context>
chip_gen: v7x
topology: tpu7x:2x2x1
jax: 0.10.0
libtpu: 0.0.40
codegen_flags: <defaults>
</compile_context>

<pallas_src>
import math

import numpy as np

import jax
import jax.numpy as jnp
from jax.experimental import pallas as pl
from jax.experimental.pallas import tpu as pltpu

N_FFT = 1024
HOP = 512                     # n_fft // 2 -> each frame = [chunk_r | chunk_{r+1}]
N_FREQ = N_FFT // 2 + 1       # 513 one-sided bins
F_KERN = 512                  # bins 0..511 in the kernel (lane-dense); Nyquist outside
MAX_TM = 256                  # MXU-shaped row tile


def _round_up(x, m):
    return ((x + m - 1) // m) * m


def _stft_log_mag_kernel(frames_ref, basis_ref, out_ref):
    """out = 0.5*log10(clamp(|frames @ [cos|sin] basis|^2, 1e-8)) for one row tile."""
    # (tm, 1024) @ (1024, 1024) on the MXU, f32 accumulation.
    prod = jnp.dot(frames_ref[...], basis_ref[...],
                   preferred_element_type=jnp.float32)
    re = prod[:, :F_KERN]
    im = prod[:, F_KERN:]
    # log10(sqrt(clamp(x, 1e-8))) == 0.5 * log10(clamp(x, 1e-8)); halves EUP work.
    out_ref[...] = 0.5 * jnp.log10(jnp.maximum(re * re + im * im, 1e-8))


def _log_stft_mag_pallas(frames_cd, basis_cd, tm, m_pad):
    grid = (m_pad // tm,)
    itemsize = jnp.dtype(frames_cd.dtype).itemsize
    cost = pl.CostEstimate(
        flops=2 * m_pad * N_FFT * (2 * F_KERN),
        transcendentals=m_pad * F_KERN,
        bytes_accessed=(m_pad * N_FFT * itemsize          # frames
                        + N_FFT * 2 * F_KERN * itemsize   # resident cos|sin basis
                        + m_pad * F_KERN * 4),            # f32 output
    )
    return pl.pallas_call(
        _stft_log_mag_kernel,
        out_shape=jax.ShapeDtypeStruct((m_pad, F_KERN), jnp.float32),
        grid_spec=pltpu.PrefetchScalarGridSpec(
            num_scalar_prefetch=0,
            grid=grid,
            in_specs=[
                pl.BlockSpec((tm, N_FFT), lambda i: (i, 0)),          # frame rows
                pl.BlockSpec((N_FFT, 2 * F_KERN), lambda i: (0, 0)),  # basis (resident)
            ],
            out_specs=pl.BlockSpec((tm, F_KERN), lambda i: (i, 0)),
        ),
        compiler_params=pltpu.CompilerParams(
            dimension_semantics=("parallel",)),
        cost_estimate=cost,
    )(frames_cd, basis_cd)


class PitchLoss:
    """JAX/Pallas port of noodling.loss.PitchLoss (forward pass).

    compute_dtype=jnp.bfloat16 (default) feeds the MXU its native operand type
    (accumulation stays f32); pass jnp.float32 for closer-to-torch f32 math.
    """

    def __init__(self, sample_rate, compute_dtype=jnp.bfloat16):
        self.sample_rate = sample_rate
        self.compute_dtype = compute_dtype

        n = np.arange(N_FFT)
        # torch.hann_window(1024): periodic Hann window.
        window = 0.5 - 0.5 * np.cos(2.0 * np.pi * n / N_FFT)
        self.window = jnp.asarray(window, dtype=jnp.float32)

        # Windowed one-sided DFT basis for bins 0..511, cos|sin concatenated
        # along lanes into one (1024, 1024) RHS.  Phase is reduced mod N in
        # float64 so the basis is accurate to the operand dtype's rounding.
        k = np.arange(F_KERN)
        phase = (2.0 * np.pi / N_FFT) * ((n[:, None] * k[None, :]) % N_FFT)
        basis = np.concatenate([np.cos(phase), np.sin(phase)], axis=1)
        basis = basis * window[:, None]
        self.basis = jnp.asarray(basis, dtype=compute_dtype)     # (1024, 1024)

        # Nyquist bin (k = 512): cos(pi*n) = (-1)^n, sin = 0.  Applied as an
        # exact f32 reduction in the wrapper (negligible cost, keeps the
        # kernel's output lane width a clean multiple of 128).
        alt = np.where(n % 2 == 0, 1.0, -1.0)
        self.nyq_basis = jnp.asarray(window * alt, dtype=jnp.float32)

        self._stft_jit = jax.jit(self._stft_impl)

    def _stft_impl(self, audio):
        # audio: (B, 1, T) -> log10 |STFT|: (B, 513, n_frames)
        audio = jnp.squeeze(audio, axis=1).astype(jnp.float32)    # (B, T)
        b, t = audio.shape
        n_frames = 1 + t // HOP                                   # torch.stft, center=True
        n_chunks = n_frames + 1

        # torch.stft(center=True): reflect-pad n_fft//2 on each side.  With
        # hop == n_fft//2 the padded signal splits into non-overlapping
        # 512-sample chunks and frame r == [chunk_r | chunk_{r+1}], so the
        # frames slab is a slice+concat (no gather).
        padded = jnp.pad(audio, ((0, 0), (N_FFT // 2, N_FFT // 2)), mode="reflect")
        chunks = padded[:, :n_chunks * HOP].reshape(b, n_chunks, HOP)
        frames = jnp.concatenate([chunks[:, :-1], chunks[:, 1:]], axis=2)
        m = b * n_frames
        frames_flat = frames.reshape(m, N_FFT)                    # (M, 1024) f32

        # MXU-shaped row tile (multiple of 16 for bf16 sublane packing), capped
        # so the grid keeps >= 2 steps whenever there is enough work.
        tm = min(MAX_TM, max(16, _round_up(-(-m // 2), 16)))
        m_pad = _round_up(m, tm)
        frames_pad = jnp.pad(frames_flat, ((0, m_pad - m), (0, 0)))

        out = _log_stft_mag_pallas(frames_pad.astype(self.compute_dtype),
                                   self.basis, tm, m_pad)[:m]     # (M, 512) f32

        # Nyquist bin (k = 512): exact f32 elementwise reduce, negligible cost.
        nyq = frames_flat @ self.nyq_basis                        # (M,)
        log_nyq = 0.5 * jnp.log10(jnp.maximum(nyq * nyq, 1e-8))

        full = jnp.concatenate([out, log_nyq[:, None]], axis=1)   # (M, 513)
        full = full.reshape(b, n_frames, N_FREQ)
        return jnp.transpose(full, (0, 2, 1))                     # (B, 513, n_frames)

    def stft(self, audio):
        return self._stft_jit(audio)

    def forward(self, x, y):
        assert len(x.shape) == 3
        assert len(y.shape) == 3
        pitch_x = self.stft(x)
        print(pitch_x.shape)
        # Reference module only prints the shape and returns a constant.
        return 0.0

    __call__ = forward


if __name__ == "__main__":
    key = jax.random.PRNGKey(0)
    kx, ky = jax.random.split(key)
    B, T = 2, 4096                                   # (B, 1, T) mono audio
    x = jax.random.normal(kx, (B, 1, T), dtype=jnp.float32)
    y = jax.random.normal(ky, (B, 1, T), dtype=jnp.float32)

    # Gold reference in float64 numpy: explicit framing + rfft (matches
    # torch.stft(center=True, hann periodic window, onesided)).
    n_frames = 1 + T // HOP
    x_np = np.asarray(x, dtype=np.float64)[:, 0, :]
    pad_np = np.pad(x_np, ((0, 0), (N_FFT // 2, N_FFT // 2)), mode="reflect")
    idx = np.arange(n_frames)[:, None] * HOP + np.arange(N_FFT)[None, :]
    win64 = 0.5 - 0.5 * np.cos(2.0 * np.pi * np.arange(N_FFT) / N_FFT)
    frames_ref = pad_np[:, idx] * win64[None, None, :]
    spec = np.fft.rfft(frames_ref, axis=-1)
    mag_ref = np.sqrt(np.maximum(np.abs(spec) ** 2, 1e-8))
    log_ref = np.transpose(np.log10(mag_ref), (0, 2, 1))          # (B, 513, n_frames)
    mag_ref = np.transpose(mag_ref, (0, 2, 1))
    scale = float(np.median(mag_ref))

    def check(out_dev, tag):
        out = np.asarray(jax.block_until_ready(out_dev), dtype=np.float64)
        assert out.shape == log_ref.shape, (tag, out.shape, log_ref.shape)
        assert np.all(np.isfinite(out)), tag
        mag = 10.0 ** out
        # Magnitude-relative error with a floor: near-null STFT bins are
        # ill-conditioned in log/relative terms at any finite precision, so
        # they must not dominate the check.
        rel = np.abs(mag - mag_ref) / (mag_ref + 0.1 * scale)
        assert float(np.max(rel)) < 0.35, (tag, "max rel", float(np.max(rel)))
        # Energetic bins must agree tightly in log10 magnitude — any framing /
        # basis / layout / Nyquist mistake produces O(1) errors here.
        strong = mag_ref > 0.25 * scale
        err_log = np.abs(out - log_ref)
        assert float(np.max(err_log[strong])) < 0.05, (tag, float(np.max(err_log[strong])))
        assert float(np.mean(err_log)) < 0.05, (tag, float(np.mean(err_log)))

    # f32 operands (closest to the torch module's f32 math).
    loss_f32 = PitchLoss(sample_rate=16000, compute_dtype=jnp.float32)
    check(loss_f32.stft(x), "f32")

    # Default bf16-operand path (f32 MXU accumulation).
    loss_bf16 = PitchLoss(sample_rate=16000)
    check(loss_bf16.stft(x), "bf16")

    out = loss_bf16(x, y)
    assert out == 0.0
    print("KERNEL_OK")
</pallas_src>

<mosaic_0001>
module attributes {stable_mosaic.version = 11 : i64} {
  func.func @_stft_log_mag_kernel(%arg0: i32, %arg1: memref<16x1024xf32, #tpu.memory_space<vmem>>, %arg2: memref<1024x1024xf32, #tpu.memory_space<vmem>>, %arg3: memref<16x512xf32, #tpu.memory_space<vmem>>) attributes {dimension_semantics = [#tpu.dimension_semantics<parallel>], iteration_bounds = array<i64: 2>, scalar_prefetch = 0 : i64, scratch_operands = 0 : i64, tpu.core_type = #tpu.core_type<tc>, window_params = [{transform_indices = @transform_0, window_bounds = array<i64: 16, 1024>}, {pipeline_mode = #tpu.pipeline_mode<synchronous>, transform_indices = @transform_1, window_bounds = array<i64: 1024, 1024>}, {transform_indices = @transform_2, window_bounds = array<i64: 16, 512>}]} {
    %c0 = arith.constant 0 : index
    %c0_0 = arith.constant 0 : index
    %0 = vector.load %arg1[%c0, %c0_0] : memref<16x1024xf32, #tpu.memory_space<vmem>>, vector<16x1024xf32>
    %c0_1 = arith.constant 0 : index
    %c0_2 = arith.constant 0 : index
    %1 = vector.load %arg2[%c0_1, %c0_2] : memref<1024x1024xf32, #tpu.memory_space<vmem>>, vector<1024x1024xf32>
    %cst = arith.constant dense<0.000000e+00> : vector<16x1024xf32>
    %2 = tpu.matmul %0, %1, %cst {dimension_numbers = #tpu.dot_dimension_numbers<[1], [0], [0], [1], [0, 0, 1, 1], [], []>} : vector<16x1024xf32>, vector<1024x1024xf32>, vector<16x1024xf32> -> vector<16x1024xf32>
    %3 = vector.extract_strided_slice %2 {offsets = [0, 0], sizes = [16, 512], strides = [1, 1]} : vector<16x1024xf32> to vector<16x512xf32>
    %4 = vector.extract_strided_slice %2 {offsets = [0, 512], sizes = [16, 512], strides = [1, 1]} : vector<16x1024xf32> to vector<16x512xf32>
    %5 = arith.mulf %3, %3 : vector<16x512xf32>
    %6 = arith.mulf %4, %4 : vector<16x512xf32>
    %7 = arith.addf %5, %6 : vector<16x512xf32>
    %cst_3 = arith.constant 9.99999993E-9 : f32
    %8 = vector.broadcast %cst_3 : f32 to vector<16x512xf32>
    %9 = arith.maximumf %7, %8 : vector<16x512xf32>
    %10 = math.log %9 : vector<16x512xf32>
    %cst_4 = arith.constant 0.434294492 : f32
    %11 = vector.broadcast %cst_4 : f32 to vector<16x512xf32>
    %12 = arith.mulf %10, %11 : vector<16x512xf32>
    %cst_5 = arith.constant 5.000000e-01 : f32
    %13 = vector.broadcast %cst_5 : f32 to vector<16x512xf32>
    %14 = arith.mulf %13, %12 : vector<16x512xf32>
    %c0_6 = arith.constant 0 : index
    %c0_7 = arith.constant 0 : index
    %15 = vector.load %arg3[%c0_6, %c0_7] : memref<16x512xf32, #tpu.memory_space<vmem>>, vector<16x512xf32>
    tpu.vector_store %arg3[%c0_6, %c0_7], %14 {strides = array<i32>} : memref<16x512xf32, #tpu.memory_space<vmem>>, vector<16x512xf32>,
    return
  }
  func.func @transform_0(%arg0: i32) -> (i32, i32) {
    %c0_i32 = arith.constant 0 : i32
    %c0_i32_0 = arith.constant 0 : i32
    return %arg0, %c0_i32 : i32, i32
  }
  func.func @transform_1(%arg0: i32) -> (i32, i32) {
    %c0_i32 = arith.constant 0 : i32
    %c0_i32_0 = arith.constant 0 : i32
    %c0_i32_1 = arith.constant 0 : i32
    return %c0_i32, %c0_i32_0 : i32, i32
  }
  func.func @transform_2(%arg0: i32) -> (i32, i32) {
    %c0_i32 = arith.constant 0 : i32
    %c0_i32_0 = arith.constant 0 : i32
    return %arg0, %c0_i32 : i32, i32
  }
}

</mosaic_0001>

<llo_original>
// kernel: _stft_impl.1
$region0: #{_stft_impl.1}
  #allocation0 [shape = 'u32[]', space=smem, size = 0x4, offset = 0x4, fixed_abs, tag = 'smem constant byte address 0x4 - core index']
  #allocation1 [shape = 'u32[144,128]{1,0:T(1,128)}', space=vmem, size = 0x12000, scoped, tag = 'internal scratch']
  %s0 = inlined_call_operand.vmem [shape: f32[32,1024], index: 0, kind: input, shape index: {}]
  %s1 = inlined_call_operand.hbm [shape: f32[1024,1024], index: 1, kind: input, shape index: {}]
  %s2 = inlined_call_operand.vmem [shape: f32[32,512], index: 2, kind: output, shape index: {}]
  %s3 = sld [smem:[#allocation0]]
  $region45: #{_stft_impl.1} parent=0
    _
  %s5 = ssub.s32 1, %s3
  %s6 = scalar_select 0, %s5, %s3
  $region1: #{_stft_impl.1} parent=0
    #allocation2 [shape = 'u8[4194304]{0}', space=vmem, size = 0x400000, scoped, tag = 'input window, operand 1, single buffered']
    #allocation3 [shape = 's32[2]{0}', space=sflag, size = 0x8, scoped, tag = 'scoped memory for _stft_impl.1']
    %7 = vsyncpa [#allocation3], 0
    loop: start=0, step=1, limit=4
    $region2: #{_stft_impl.1} parent=1 // loop_pre_header
      _
    $region3: #{_stft_impl.1} parent=1 // loop_header
      %s9 = sphi 0, %s13
      %p10 = scmp.ge.s32.totalorder %s9, 4
      %s19 = sphi 0, %s21
      %s22 = sphi 0, %s19
      %s23 = sphi 0, %s22
      %s39 = sphi 0, %s23
      %s43 = sphi 0, %s43
      %s45 = sphi 0, %s43
      %s46 = sphi 0, %s45
      %s60 = sphi 0, %s46
      %s66 = sphi 0, %s68
      %s69 = sphi 0, %s66
      %s70 = sphi 0, %s69
      %s86 = sphi 0, %s70
    $region4: #{_stft_impl.1} parent=1 // loop_header_branch
      %12 = sbr.rel (%p10) target = $region8
    $region5: #{_stft_impl.1} parent=1 // loop_body
      %s14 = ssub.s32 %s9, 1
      %s15 = ssub.s32 %s9, 2
      %s16 = sadd.s32 %s9, 1
      %s17 = ssub.s32 %s9, %s16
      %p18 = scmp.eq.s32.totalorder %s17, 0
      %s20 = sadd.s32 %s19, 1
      %s21 = scalar_select %p18, %s19, %s20
      %p24 = pneg %p18
      %p25 = scmp.eq.s32.totalorder %s9, 1
      %p26 = por %p24, %p25
      %p27 = scmp.ne.s32.totalorder %s19, %s22
      %p28 = scmp.eq.s32.totalorder %s9, 0
      %p29 = por %p27, %p28
      %p30 = scmp.ne.s32.totalorder %s19, %s22
      %p31 = scmp.eq.s32.totalorder %s14, 1
      %p32 = por %p30, %p31
      %p33 = scmp.ne.s32.totalorder %s22, %s23
      %p34 = scmp.eq.s32.totalorder %s14, 0
      %p35 = por %p33, %p34
      %p36 = scmp.ne.s32.totalorder %s22, %s23
      %p37 = scmp.eq.s32.totalorder %s15, 1
      %p38 = por %p36, %p37
      %p40 = scmp.ne.s32.totalorder %s23, %s39
      %p41 = scmp.eq.s32.totalorder %s15, 0
      %p42 = por %p40, %p41
      %s44 = sadd.s32 %s43, 1
      %p47 = scmp.eq.s32.totalorder %s9, 1
      %p48 = scmp.ne.s32.totalorder %s43, %s45
      %p49 = scmp.eq.s32.totalorder %s9, 0
      %p50 = por %p48, %p49
      %p51 = scmp.ne.s32.totalorder %s43, %s45
      %p52 = scmp.eq.s32.totalorder %s14, 1
      %p53 = por %p51, %p52
      %p54 = scmp.ne.s32.totalorder %s45, %s46
      %p55 = scmp.eq.s32.totalorder %s14, 0
      %p56 = por %p54, %p55
      %p57 = scmp.ne.s32.totalorder %s45, %s46
      %p58 = scmp.eq.s32.totalorder %s15, 1
      %p59 = por %p57, %p58
      %p61 = scmp.ne.s32.totalorder %s46, %s60
      %p62 = scmp.eq.s32.totalorder %s15, 0
      %p63 = por %p61, %p62
      %s64 = ssub.s32 %s9, %s16
      %p65 = scmp.eq.s32.totalorder %s64, 0
      %s67 = sadd.s32 %s66, 1
      %s68 = scalar_select %p65, %s66, %s67
      %p71 = pneg %p65
      %p72 = scmp.eq.s32.totalorder %s9, 1
      %p73 = por %p71, %p72
      %p74 = scmp.ne.s32.totalorder %s66, %s69
      %p75 = scmp.eq.s32.totalorder %s9, 0
      %p76 = por %p74, %p75
      %p77 = scmp.ne.s32.totalorder %s66, %s69
      %p78 = scmp.eq.s32.totalorder %s14, 1
      %p79 = por %p77, %p78
      %p80 = scmp.ne.s32.totalorder %s69, %s70
      %p81 = scmp.eq.s32.totalorder %s14, 0
      %p82 = por %p80, %p81
      %p83 = scmp.ne.s32.totalorder %s69, %s70
      %p84 = scmp.eq.s32.totalorder %s15, 1
      %p85 = por %p83, %p84
      %p87 = scmp.ne.s32.totalorder %s70, %s86
      %p88 = scmp.eq.s32.totalorder %s15, 0
      %p89 = por %p87, %p88
      %p90 = scmp.le.s32.totalorder 1, %s9
      %p91 = scmp.lt.s32.totalorder %s9, 3
      %p92 = pnand %p90, %p91
      %p93 = pneg %p92
      // Predicated region
      $region9: #{_stft_impl.1} parent=5 // pred_check
        _
      $region10: #{_stft_impl.1} parent=5 // pred_check_branch
        %95 = sbr.rel (%p92) target = $region12
      $region11: #{_stft_impl.1} parent=5 // pred_region
        %s96 = ssub.s32 %s9, 1
        // Predicated region
        $region13: #{_stft_impl.1} parent=11 // pred_check
          %p97 = pneg %p56
        $region14: #{_stft_impl.1} parent=11 // pred_check_branch
          %99 = sbr.rel (%p97) target = $region16
        $region15: #{_stft_impl.1} parent=11 // pred_region
          %s101 = ssub.s32 131072, 131072
          %102 = vsyncadd [#allocation3], %s101
          %s103 = sshll.u32 [#allocation2], 4
          %s104 = int_to_ptr.vmem [resolvable:$true] %s103
          %109 = dma.hbm_to_vmem [thread:$0]  %s1, 131072, %s104, [#allocation3], 1024, 1024, 64
        $region16: #{_stft_impl.1} parent=11 // pred_fallthru
          _
      $region12: #{_stft_impl.1} parent=5 // pred_fallthru
        _
      %p110 = scmp.lt.s32.totalorder %s9, 2
      // Predicated region
      $region17: #{_stft_impl.1} parent=5 // pred_check
        %p111 = pneg %p110
      $region18: #{_stft_impl.1} parent=5 // pred_check_branch
        %113 = sbr.rel (%p111) target = $region20
      $region19: #{_stft_impl.1} parent=5 // pred_region
        // Predicated region
        $region21: #{_stft_impl.1} parent=19 // pred_check
          %p114 = pneg %p29
        $region22: #{_stft_impl.1} parent=19 // pred_check_branch
          %116 = sbr.rel (%p114) target = $region24
        $region23: #{_stft_impl.1} parent=19 // pred_region
          %s117 = smul.u32 2, %s9
          %p118 = scmp.lt.s32.totalorder %s117, 3
          %s119 = scalar_select %p118, %s117, 3
          %s120 = smul.addr %s119, 8
          %s121 = smul.addr %s120, 8
          %s122 = scalar_lea.vmem %s0, %s121
          %s123 = smul.u32 2, %s9
        $region24: #{_stft_impl.1} parent=19 // pred_fallthru
          _
      $region20: #{_stft_impl.1} parent=5 // pred_fallthru
        _
      %p124 = scmp.le.s32.totalorder 1, %s9
      %p125 = scmp.lt.s32.totalorder %s9, 3
      %p126 = pnand %p124, %p125
      %p127 = pneg %p126
      // Predicated region
      $region25: #{_stft_impl.1} parent=5 // pred_check
        _
      $region26: #{_stft_impl.1} parent=5 // pred_check_branch
        %129 = sbr.rel (%p126) target = $region28
      $region27: #{_stft_impl.1} parent=5 // pred_region
        %s130 = ssub.s32 %s9, 1
        // Predicated region
        $region29: #{_stft_impl.1} parent=27 // pred_check
          %p131 = pneg %p56
        $region30: #{_stft_impl.1} parent=27 // pred_check_branch
          %133 = sbr.rel (%p131) target = $region32
        $region31: #{_stft_impl.1} parent=27 // pred_region
          %134 = dma.done [#allocation3], 131072
        $region32: #{_stft_impl.1} parent=27 // pred_fallthru
          _
        %s135 = smul.u32 2, %s14
        %p136 = scmp.lt.s32.totalorder %s135, 3
        %s137 = scalar_select %p136, %s135, 3
        %s138 = smul.addr %s137, 8
        %s139 = smul.addr %s138, 8
        %s140 = scalar_lea.vmem %s0, %s139
        %p141 = pneg %p35
        %p142 = pneg %p32
        %p143 = pneg %p56
        %p144 = pneg %p53
        %p145 = pneg %p82
        %p146 = pneg %p79
        %s147 = smul.u32 2, %s14
        %p148 = scmp.lt.s32.totalorder %s147, 3
        %s149 = scalar_select %p148, %s147, 3
        %s150 = smul.addr %s149, 4
        %s151 = smul.addr %s150, 8
        %s152 = scalar_lea.vmem %s2, %s151
        %s153 = smul.u32 2, %s14
        %p154 = scmp.lt.s32.totalorder %s153, 3
        %s155 = scalar_select %p154, %s153, 3
        %s156 = smul.addr %s155, 8
        %s157 = smul.addr %s156, 8
        %s158 = scalar_lea.vmem %s0, %s157
        %s159 = smul.u32 2, %s14
        %s160 = smul.u32 2, %s14
        %p161 = scmp.lt.s32.totalorder %s160, 3
        %s162 = scalar_select %p161, %s160, 3
        %s163 = smul.addr %s162, 4
        %s164 = smul.addr %s163, 8
        %s165 = scalar_lea.vmem %s2, %s164
        %s166 = smul.u32 2, %s14
        %v167 = vld [vmem:[%s158] sm:$0xff]
        %v168 = vld [vmem:[%s158 + $0x8] sm:$0xff]
        %v169 = vld [vmem:[%s158 + $0x10] sm:$0xff]
        %v170 = vld [vmem:[%s158 + $0x18] sm:$0xff]
        %v171 = vld [vmem:[%s158 + $0x20] sm:$0xff]
        %v172 = vld [vmem:[%s158 + $0x28] sm:$0xff]
        %v173 = vld [vmem:[%s158 + $0x30] sm:$0xff]
        %v174 = vld [vmem:[%s158 + $0x38] sm:$0xff]
        %v175 = vld [vmem:[%s158 + $0x40] sm:$0xff]
        %v176 = vld [vmem:[%s158 + $0x48] sm:$0xff]
        %v177 = vld [vmem:[%s158 + $0x50] sm:$0xff]
        %v178 = vld [vmem:[%s158 + $0x58] sm:$0xff]
        %v179 = vld [vmem:[%s158 + $0x60] sm:$0xff]
        %v180 = vld [vmem:[%s158 + $0x68] sm:$0xff]
        %v181 = vld [vmem:[%s158 + $0x70] sm:$0xff]
        %v182 = vld [vmem:[%s158 + $0x78] sm:$0xff]
        %v183 = vld [vmem:[#allocation2] sm:$0xff]
        %v184 = vld [vmem:[#allocation2 + $0x8] sm:$0xff]
        %v185 = vld [vmem:[#allocation2 + $0x10] sm:$0xff]
        %v186 = vld [vmem:[#allocation2 + $0x18] sm:$0xff]
        %v187 = vld [vmem:[#allocation2 + $0x20] sm:$0xff]
        %v188 = vld [vmem:[#allocation2 + $0x28] sm:$0xff]
        %v189 = vld [vmem:[#allocation2 + $0x30] sm:$0xff]
        %v190 = vld [vmem:[#allocation2 + $0x38] sm:$0xff]
        %v191 = vld [vmem:[#allocation2 + $0x40] sm:$0xff]
        %v192 = vld [vmem:[#allocation2 + $0x48] sm:$0xff]
        %v193 = vld [vmem:[#allocation2 + $0x50] sm:$0xff]
        %v194 = vld [vmem:[#allocation2 + $0x58] sm:$0xff]
        %v195 = vld [vmem:[#allocation2 + $0x60] sm:$0xff]
        %v196 = vld [vmem:[#allocation2 + $0x68] sm:$0xff]
        %v197 = vld [vmem:[#allocation2 + $0x70] sm:$0xff]
        %v198 = vld [vmem:[#allocation2 + $0x78] sm:$0xff]
        %v199 = vld [vmem:[#allocation2 + $0x80] sm:$0xff]
        %v200 = vld [vmem:[#allocation2 + $0x88] sm:$0xff]
        %v201 = vld [vmem:[#allocation2 + $0x90] sm:$0xff]
        %v202 = vld [vmem:[#allocation2 + $0x98] sm:$0xff]
        %v203 = vld [vmem:[#allocation2 + $0xa0] sm:$0xff]
        %v204 = vld [vmem:[#allocation2 + $0xa8] sm:$0xff]
        %v205 = vld [vmem:[#allocation2 + $0xb0] sm:$0xff]
        %v206 = vld [vmem:[#allocation2 + $0xb8] sm:$0xff]
        %v207 = vld [vmem:[#allocation2 + $0xc0] sm:$0xff]
        %v208 = vld [vmem:[#allocation2 + $0xc8] sm:$0xff]
        %v209 = vld [vmem:[#allocation2 + $0xd0] sm:$0xff]
        %v210 = vld [vmem:[#allocation2 + $0xd8] sm:$0xff]
        %v211 = vld [vmem:[#allocation2 + $0xe0] sm:$0xff]
        %v212 = vld [vmem:[#allocation2 + $0xe8] sm:$0xff]
        %v213 = vld [vmem:[#allocation2 + $0xf0] sm:$0xff]
        %v214 = vld [vmem:[#allocation2 + $0xf8] sm:$0xff]
        %v215 = vld [vmem:[#allocation2 + $0x100] sm:$0xff]
        %v216 = vld [vmem:[#allocation2 + $0x108] sm:$0xff]
        %v217 = vld [vmem:[#allocation2 + $0x110] sm:$0xff]
        %v218 = vld [vmem:[#allocation2 + $0x118] sm:$0xff]
        %v219 = vld [vmem:[#allocation2 + $0x120] sm:$0xff]
        %v220 = vld [vmem:[#allocation2 + $0x128] sm:$0xff]
        %v221 = vld [vmem:[#allocation2 + $0x130] sm:$0xff]
        %v222 = vld [vmem:[#allocation2 + $0x138] sm:$0xff]
        %v223 = vld [vmem:[#allocation2 + $0x140] sm:$0xff]
        %v224 = vld [vmem:[#allocation2 + $0x148] sm:$0xff]
        %v225 = vld [vmem:[#allocation2 + $0x150] sm:$0xff]
        %v226 = vld [vmem:[#allocation2 + $0x158] sm:$0xff]
        %v227 = vld [vmem:[#allocation2 + $0x160] sm:$0xff]
        %v228 = vld [vmem:[#allocation2 + $0x168] sm:$0xff]
        %v229 = vld [vmem:[#allocation2 + $0x170] sm:$0xff]
        %v230 = vld [vmem:[#allocation2 + $0x178] sm:$0xff]
        %v231 = vld [vmem:[#allocation2 + $0x180] sm:$0xff]
        %v232 = vld [vmem:[#allocation2 + $0x188] sm:$0xff]
        %v233 = vld [vmem:[#allocation2 + $0x190] sm:$0xff]
        %v234 = vld [vmem:[#allocation2 + $0x198] sm:$0xff]
        %v235 = vld [vmem:[#allocation2 + $0x1a0] sm:$0xff]
        %v236 = vld [vmem:[#allocation2 + $0x1a8] sm:$0xff]
        %v237 = vld [vmem:[#allocation2 + $0x1b0] sm:$0xff]
        %v238 = vld [vmem:[#allocation2 + $0x1b8] sm:$0xff]
        %v239 = vld [vmem:[#allocation2 + $0x1c0] sm:$0xff]
        %v240 = vld [vmem:[#allocation2 + $0x1c8] sm:$0xff]
        %v241 = vld [vmem:[#allocation2 + $0x1d0] sm:$0xff]
        %v242 = vld [vmem:[#allocation2 + $0x1d8] sm:$0xff]
        %v243 = vld [vmem:[#allocation2 + $0x1e0] sm:$0xff]
        %v244 = vld [vmem:[#allocation2 + $0x1e8] sm:$0xff]
        %v245 = vld [vmem:[#allocation2 + $0x1f0] sm:$0xff]
        %v246 = vld [vmem:[#allocation2 + $0x1f8] sm:$0xff]
        %v247 = vld [vmem:[#allocation2 + $0x200] sm:$0xff]
        %v248 = vld [vmem:[#allocation2 + $0x208] sm:$0xff]
        %v249 = vld [vmem:[#allocation2 + $0x210] sm:$0xff]
        %v250 = vld [vmem:[#allocation2 + $0x218] sm:$0xff]
        %v251 = vld [vmem:[#allocation2 + $0x220] sm:$0xff]
        %v252 = vld [vmem:[#allocation2 + $0x228] sm:$0xff]
        %v253 = vld [vmem:[#allocation2 + $0x230] sm:$0xff]
        %v254 = vld [vmem:[#allocation2 + $0x238] sm:$0xff]
        %v255 = vld [vmem:[#allocation2 + $0x240] sm:$0xff]
        %v256 = vld [vmem:[#allocation2 + $0x248] sm:$0xff]
        %v257 = vld [vmem:[#allocation2 + $0x250] sm:$0xff]
        %v258 = vld [vmem:[#allocation2 + $0x258] sm:$0xff]
        %v259 = vld [vmem:[#allocation2 + $0x260] sm:$0xff]
        %v260 = vld [vmem:[#allocation2 + $0x268] sm:$0xff]
        %v261 = vld [vmem:[#allocation2 + $0x270] sm:$0xff]
        %v262 = vld [vmem:[#allocation2 + $0x278] sm:$0xff]
        %v263 = vld [vmem:[#allocation2 + $0x280] sm:$0xff]
        %v264 = vld [vmem:[#allocation2 + $0x288] sm:$0xff]
        %v265 = vld [vmem:[#allocation2 + $0x290] sm:$0xff]
        %v266 = vld [vmem:[#allocation2 + $0x298] sm:$0xff]
        %v267 = vld [vmem:[#allocation2 + $0x2a0] sm:$0xff]
        %v268 = vld [vmem:[#allocation2 + $0x2a8] sm:$0xff]
        %v269 = vld [vmem:[#allocation2 + $0x2b0] sm:$0xff]
        %v270 = vld [vmem:[#allocation2 + $0x2b8] sm:$0xff]
        %v271 = vld [vmem:[#allocation2 + $0x2c0] sm:$0xff]
        %v272 = vld [vmem:[#allocation2 + $0x2c8] sm:$0xff]
        %v273 = vld [vmem:[#allocation2 + $0x2d0] sm:$0xff]
        %v274 = vld [vmem:[#allocation2 + $0x2d8] sm:$0xff]
        %v275 = vld [vmem:[#allocation2 + $0x2e0] sm:$0xff]
        %v276 = vld [vmem:[#allocation2 + $0x2e8] sm:$0xff]
        %v277 = vld [vmem:[#allocation2 + $0x2f0] sm:$0xff]
        %v278 = vld [vmem:[#allocation2 + $0x2f8] sm:$0xff]
        %v279 = vld [vmem:[#allocation2 + $0x300] sm:$0xff]
        %v280 = vld [vmem:[#allocation2 + $0x308] sm:$0xff]
        %v281 = vld [vmem:[#allocation2 + $0x310] sm:$0xff]
        %v282 = vld [vmem:[#allocation2 + $0x318] sm:$0xff]
        %v283 = vld [vmem:[#allocation2 + $0x320] sm:$0xff]
        %v284 = vld [vmem:[#allocation2 + $0x328] sm:$0xff]
        %v285 = vld [vmem:[#allocation2 + $0x330] sm:$0xff]
        %v286 = vld [vmem:[#allocation2 + $0x338] sm:$0xff]
        %v287 = vld [vmem:[#allocation2 + $0x340] sm:$0xff]
        %v288 = vld [vmem:[#allocation2 + $0x348] sm:$0xff]
        %v289 = vld [vmem:[#allocation2 + $0x350] sm:$0xff]
        %v290 = vld [vmem:[#allocation2 + $0x358] sm:$0xff]
        %v291 = vld [vmem:[#allocation2 + $0x360] sm:$0xff]
        %v292 = vld [vmem:[#allocation2 + $0x368] sm:$0xff]
        %v293 = vld [vmem:[#allocation2 + $0x370] sm:$0xff]
        %v294 = vld [vmem:[#allocation2 + $0x378] sm:$0xff]
        %v295 = vld [vmem:[#allocation2 + $0x380] sm:$0xff]
        %v296 = vld [vmem:[#allocation2 + $0x388] sm:$0xff]
        %v297 = vld [vmem:[#allocation2 + $0x390] sm:$0xff]
        %v298 = vld [vmem:[#allocation2 + $0x398] sm:$0xff]
        %v299 = vld [vmem:[#allocation2 + $0x3a0] sm:$0xff]
        %v300 = vld [vmem:[#allocation2 + $0x3a8] sm:$0xff]
        %v301 = vld [vmem:[#allocation2 + $0x3b0] sm:$0xff]
        %v302 = vld [vmem:[#allocation2 + $0x3b8] sm:$0xff]
        %v303 = vld [vmem:[#allocation2 + $0x3c0] sm:$0xff]
        %v304 = vld [vmem:[#allocation2 + $0x3c8] sm:$0xff]
        %v305 = vld [vmem:[#allocation2 + $0x3d0] sm:$0xff]
        %v306 = vld [vmem:[#allocation2 + $0x3d8] sm:$0xff]
        %v307 = vld [vmem:[#allocation2 + $0x3e0] sm:$0xff]
        %v308 = vld [vmem:[#allocation2 + $0x3e8] sm:$0xff]
        %v309 = vld [vmem:[#allocation2 + $0x3f0] sm:$0xff]
        %v310 = vld [vmem:[#allocation2 + $0x3f8] sm:$0xff]
        %v311 = vld [vmem:[#allocation2 + $0x400] sm:$0xff]
        %v312 = vld [vmem:[#allocation2 + $0x408] sm:$0xff]
        %v313 = vld [vmem:[#allocation2 + $0x410] sm:$0xff]
        %v314 = vld [vmem:[#allocation2 + $0x418] sm:$0xff]
        %v315 = vld [vmem:[#allocation2 + $0x420] sm:$0xff]
        %v316 = vld [vmem:[#allocation2 + $0x428] sm:$0xff]
        %v317 = vld [vmem:[#allocation2 + $0x430] sm:$0xff]
        %v318 = vld [vmem:[#allocation2 + $0x438] sm:$0xff]
        %v319 = vld [vmem:[#allocation2 + $0x440] sm:$0xff]
        %v320 = vld [vmem:[#allocation2 + $0x448] sm:$0xff]
        %v321 = vld [vmem:[#allocation2 + $0x450] sm:$0xff]
        %v322 = vld [vmem:[#allocation2 + $0x458] sm:$0xff]
        %v323 = vld [vmem:[#allocation2 + $0x460] sm:$0xff]
        %v324 = vld [vmem:[#allocation2 + $0x468] sm:$0xff]
        %v325 = vld [vmem:[#allocation2 + $0x470] sm:$0xff]
        %v326 = vld [vmem:[#allocation2 + $0x478] sm:$0xff]
        %v327 = vld [vmem:[#allocation2 + $0x480] sm:$0xff]
        %v328 = vld [vmem:[#allocation2 + $0x488] sm:$0xff]
        %v329 = vld [vmem:[#allocation2 + $0x490] sm:$0xff]
        %v330 = vld [vmem:[#allocation2 + $0x498] sm:$0xff]
        %v331 = vld [vmem:[#allocation2 + $0x4a0] sm:$0xff]
        %v332 = vld [vmem:[#allocation2 + $0x4a8] sm:$0xff]
        %v333 = vld [vmem:[#allocation2 + $0x4b0] sm:$0xff]
        %v334 = vld [vmem:[#allocation2 + $0x4b8] sm:$0xff]
        %v335 = vld [vmem:[#allocation2 + $0x4c0] sm:$0xff]
        %v336 = vld [vmem:[#allocation2 + $0x4c8] sm:$0xff]
        %v337 = vld [vmem:[#allocation2 + $0x4d0] sm:$0xff]
        %v338 = vld [vmem:[#allocation2 + $0x4d8] sm:$0xff]
        %v339 = vld [vmem:[#allocation2 + $0x4e0] sm:$0xff]
        %v340 = vld [vmem:[#allocation2 + $0x4e8] sm:$0xff]
        %v341 = vld [vmem:[#allocation2 + $0x4f0] sm:$0xff]
        %v342 = vld [vmem:[#allocation2 + $0x4f8] sm:$0xff]
        %v343 = vld [vmem:[#allocation2 + $0x500] sm:$0xff]
        %v344 = vld [vmem:[#allocation2 + $0x508] sm:$0xff]
        %v345 = vld [vmem:[#allocation2 + $0x510] sm:$0xff]
        %v346 = vld [vmem:[#allocation2 + $0x518] sm:$0xff]
        %v347 = vld [vmem:[#allocation2 + $0x520] sm:$0xff]
        %v348 = vld [vmem:[#allocation2 + $0x528] sm:$0xff]
        %v349 = vld [vmem:[#allocation2 + $0x530] sm:$0xff]
        %v350 = vld [vmem:[#allocation2 + $0x538] sm:$0xff]
        %v351 = vld [vmem:[#allocation2 + $0x540] sm:$0xff]
        %v352 = vld [vmem:[#allocation2 + $0x548] sm:$0xff]
        %v353 = vld [vmem:[#allocation2 + $0x550] sm:$0xff]
        %v354 = vld [vmem:[#allocation2 + $0x558] sm:$0xff]
        %v355 = vld [vmem:[#allocation2 + $0x560] sm:$0xff]
        %v356 = vld [vmem:[#allocation2 + $0x568] sm:$0xff]
        %v357 = vld [vmem:[#allocation2 + $0x570] sm:$0xff]
        %v358 = vld [vmem:[#allocation2 + $0x578] sm:$0xff]
        %v359 = vld [vmem:[#allocation2 + $0x580] sm:$0xff]
        %v360 = vld [vmem:[#allocation2 + $0x588] sm:$0xff]
        %v361 = vld [vmem:[#allocation2 + $0x590] sm:$0xff]
        %v362 = vld [vmem:[#allocation2 + $0x598] sm:$0xff]
        %v363 = vld [vmem:[#allocation2 + $0x5a0] sm:$0xff]
        %v364 = vld [vmem:[#allocation2 + $0x5a8] sm:$0xff]
        %v365 = vld [vmem:[#allocation2 + $0x5b0] sm:$0xff]
        %v366 = vld [vmem:[#allocation2 + $0x5b8] sm:$0xff]
        %v367 = vld [vmem:[#allocation2 + $0x5c0] sm:$0xff]
        %v368 = vld [vmem:[#allocation2 + $0x5c8] sm:$0xff]
        %v369 = vld [vmem:[#allocation2 + $0x5d0] sm:$0xff]
        %v370 = vld [vmem:[#allocation2 + $0x5d8] sm:$0xff]
        %v371 = vld [vmem:[#allocation2 + $0x5e0] sm:$0xff]
        %v372 = vld [vmem:[#allocation2 + $0x5e8] sm:$0xff]
        %v373 = vld [vmem:[#allocation2 + $0x5f0] sm:$0xff]
        %v374 = vld [vmem:[#allocation2 + $0x5f8] sm:$0xff]
        %v375 = vld [vmem:[#allocation2 + $0x600] sm:$0xff]
        %v376 = vld [vmem:[#allocation2 + $0x608] sm:$0xff]
        %v377 = vld [vmem:[#allocation2 + $0x610] sm:$0xff]
        %v378 = vld [vmem:[#allocation2 + $0x618] sm:$0xff]
        %v379 = vld [vmem:[#allocation2 + $0x620] sm:$0xff]
        %v380 = vld [vmem:[#allocation2 + $0x628] sm:$0xff]
        %v381 = vld [vmem:[#allocation2 + $0x630] sm:$0xff]
        %v382 = vld [vmem:[#allocation2 + $0x638] sm:$0xff]
        %v383 = vld [vmem:[#allocation2 + $0x640] sm:$0xff]
        %v384 = vld [vmem:[#allocation2 + $0x648] sm:$0xff]
        %v385 = vld [vmem:[#allocation2 + $0x650] sm:$0xff]
        %v386 = vld [vmem:[#allocation2 + $0x658] sm:$0xff]
        %v387 = vld [vmem:[#allocation2 + $0x660] sm:$0xff]
        %v388 = vld [vmem:[#allocation2 + $0x668] sm:$0xff]
        %v389 = vld [vmem:[#allocation2 + $0x670] sm:$0xff]
        %v390 = vld [vmem:[#allocation2 + $0x678] sm:$0xff]
        %v391 = vld [vmem:[#allocation2 + $0x680] sm:$0xff]
        %v392 = vld [vmem:[#allocation2 + $0x688] sm:$0xff]
        %v393 = vld [vmem:[#allocation2 + $0x690] sm:$0xff]
        %v394 = vld [vmem:[#allocation2 + $0x698] sm:$0xff]
        %v395 = vld [vmem:[#allocation2 + $0x6a0] sm:$0xff]
        %v396 = vld [vmem:[#allocation2 + $0x6a8] sm:$0xff]
        %v397 = vld [vmem:[#allocation2 + $0x6b0] sm:$0xff]
        %v398 = vld [vmem:[#allocation2 + $0x6b8] sm:$0xff]
        %v399 = vld [vmem:[#allocation2 + $0x6c0] sm:$0xff]
        %v400 = vld [vmem:[#allocation2 + $0x6c8] sm:$0xff]
        %v401 = vld [vmem:[#allocation2 + $0x6d0] sm:$0xff]
        %v402 = vld [vmem:[#allocation2 + $0x6d8] sm:$0xff]
        %v403 = vld [vmem:[#allocation2 + $0x6e0] sm:$0xff]
        %v404 = vld [vmem:[#allocation2 + $0x6e8] sm:$0xff]
        %v405 = vld [vmem:[#allocation2 + $0x6f0] sm:$0xff]
        %v406 = vld [vmem:[#allocation2 + $0x6f8] sm:$0xff]
        %v407 = vld [vmem:[#allocation2 + $0x700] sm:$0xff]
        %v408 = vld [vmem:[#allocation2 + $0x708] sm:$0xff]
        %v409 = vld [vmem:[#allocation2 + $0x710] sm:$0xff]
        %v410 = vld [vmem:[#allocation2 + $0x718] sm:$0xff]
        %v411 = vld [vmem:[#allocation2 + $0x720] sm:$0xff]
        %v412 = vld [vmem:[#allocation2 + $0x728] sm:$0xff]
        %v413 = vld [vmem:[#allocation2 + $0x730] sm:$0xff]
        %v414 = vld [vmem:[#allocation2 + $0x738] sm:$0xff]
        %v415 = vld [vmem:[#allocation2 + $0x740] sm:$0xff]
        %v416 = vld [vmem:[#allocation2 + $0x748] sm:$0xff]
        %v417 = vld [vmem:[#allocation2 + $0x750] sm:$0xff]
        %v418 = vld [vmem:[#allocation2 + $0x758] sm:$0xff]
        %v419 = vld [vmem:[#allocation2 + $0x760] sm:$0xff]
        %v420 = vld [vmem:[#allocation2 + $0x768] sm:$0xff]
        %v421 = vld [vmem:[#allocation2 + $0x770] sm:$0xff]
        %v422 = vld [vmem:[#allocation2 + $0x778] sm:$0xff]
        %v423 = vld [vmem:[#allocation2 + $0x780] sm:$0xff]
        %v424 = vld [vmem:[#allocation2 + $0x788] sm:$0xff]
        %v425 = vld [vmem:[#allocation2 + $0x790] sm:$0xff]
        %v426 = vld [vmem:[#allocation2 + $0x798] sm:$0xff]
        %v427 = vld [vmem:[#allocation2 + $0x7a0] sm:$0xff]
        %v428 = vld [vmem:[#allocation2 + $0x7a8] sm:$0xff]
        %v429 = vld [vmem:[#allocation2 + $0x7b0] sm:$0xff]
        %v430 = vld [vmem:[#allocation2 + $0x7b8] sm:$0xff]
        %v431 = vld [vmem:[#allocation2 + $0x7c0] sm:$0xff]
        %v432 = vld [vmem:[#allocation2 + $0x7c8] sm:$0xff]
        %v433 = vld [vmem:[#allocation2 + $0x7d0] sm:$0xff]
        %v434 = vld [vmem:[#allocation2 + $0x7d8] sm:$0xff]
        %v435 = vld [vmem:[#allocation2 + $0x7e0] sm:$0xff]
        %v436 = vld [vmem:[#allocation2 + $0x7e8] sm:$0xff]
        %v437 = vld [vmem:[#allocation2 + $0x7f0] sm:$0xff]
        %v438 = vld [vmem:[#allocation2 + $0x7f8] sm:$0xff]
        %v439 = vld [vmem:[#allocation2 + $0x800] sm:$0xff]
        %v440 = vld [vmem:[#allocation2 + $0x808] sm:$0xff]
        %v441 = vld [vmem:[#allocation2 + $0x810] sm:$0xff]
        %v442 = vld [vmem:[#allocation2 + $0x818] sm:$0xff]
        %v443 = vld [vmem:[#allocation2 + $0x820] sm:$0xff]
        %v444 = vld [vmem:[#allocation2 + $0x828] sm:$0xff]
        %v445 = vld [vmem:[#allocation2 + $0x830] sm:$0xff]
        %v446 = vld [vmem:[#allocation2 + $0x838] sm:$0xff]
        %v447 = vld [vmem:[#allocation2 + $0x840] sm:$0xff]
        %v448 = vld [vmem:[#allocation2 + $0x848] sm:$0xff]
        %v449 = vld [vmem:[#allocation2 + $0x850] sm:$0xff]
        %v450 = vld [vmem:[#allocation2 + $0x858] sm:$0xff]
        %v451 = vld [vmem:[#allocation2 + $0x860] sm:$0xff]
        %v452 = vld [vmem:[#allocation2 + $0x868] sm:$0xff]
        %v453 = vld [vmem:[#allocation2 + $0x870] sm:$0xff]
        %v454 = vld [vmem:[#allocation2 + $0x878] sm:$0xff]
        %v455 = vld [vmem:[#allocation2 + $0x880] sm:$0xff]
        %v456 = vld [vmem:[#allocation2 + $0x888] sm:$0xff]
        %v457 = vld [vmem:[#allocation2 + $0x890] sm:$0xff]
        %v458 = vld [vmem:[#allocation2 + $0x898] sm:$0xff]
        %v459 = vld [vmem:[#allocation2 + $0x8a0] sm:$0xff]
        %v460 = vld [vmem:[#allocation2 + $0x8a8] sm:$0xff]
        %v461 = vld [vmem:[#allocation2 + $0x8b0] sm:$0xff]
        %v462 = vld [vmem:[#allocation2 + $0x8b8] sm:$0xff]
        %v463 = vld [vmem:[#allocation2 + $0x8c0] sm:$0xff]
        %v464 = vld [vmem:[#allocation2 + $0x8c8] sm:$0xff]
        %v465 = vld [vmem:[#allocation2 + $0x8d0] sm:$0xff]
        %v466 = vld [vmem:[#allocation2 + $0x8d8] sm:$0xff]
        %v467 = vld [vmem:[#allocation2 + $0x8e0] sm:$0xff]
        %v468 = vld [vmem:[#allocation2 + $0x8e8] sm:$0xff]
        %v469 = vld [vmem:[#allocation2 + $0x8f0] sm:$0xff]
        %v470 = vld [vmem:[#allocation2 + $0x8f8] sm:$0xff]
        %v471 = vld [vmem:[#allocation2 + $0x900] sm:$0xff]
        %v472 = vld [vmem:[#allocation2 + $0x908] sm:$0xff]
        %v473 = vld [vmem:[#allocation2 + $0x910] sm:$0xff]
        %v474 = vld [vmem:[#allocation2 + $0x918] sm:$0xff]
        %v475 = vld [vmem:[#allocation2 + $0x920] sm:$0xff]
        %v476 = vld [vmem:[#allocation2 + $0x928] sm:$0xff]
        %v477 = vld [vmem:[#allocation2 + $0x930] sm:$0xff]
        %v478 = vld [vmem:[#allocation2 + $0x938] sm:$0xff]
        %v479 = vld [vmem:[#allocation2 + $0x940] sm:$0xff]
        %v480 = vld [vmem:[#allocation2 + $0x948] sm:$0xff]
        %v481 = vld [vmem:[#allocation2 + $0x950] sm:$0xff]
        %v482 = vld [vmem:[#allocation2 + $0x958] sm:$0xff]
        %v483 = vld [vmem:[#allocation2 + $0x960] sm:$0xff]
        %v484 = vld [vmem:[#allocation2 + $0x968] sm:$0xff]
        %v485 = vld [vmem:[#allocation2 + $0x970] sm:$0xff]
        %v486 = vld [vmem:[#allocation2 + $0x978] sm:$0xff]
        %v487 = vld [vmem:[#allocation2 + $0x980] sm:$0xff]
        %v488 = vld [vmem:[#allocation2 + $0x988] sm:$0xff]
        %v489 = vld [vmem:[#allocation2 + $0x990] sm:$0xff]
        %v490 = vld [vmem:[#allocation2 + $0x998] sm:$0xff]
        %v491 = vld [vmem:[#allocation2 + $0x9a0] sm:$0xff]
        %v492 = vld [vmem:[#allocation2 + $0x9a8] sm:$0xff]
        %v493 = vld [vmem:[#allocation2 + $0x9b0] sm:$0xff]
        %v494 = vld [vmem:[#allocation2 + $0x9b8] sm:$0xff]
        %v495 = vld [vmem:[#allocation2 + $0x9c0] sm:$0xff]
        %v496 = vld [vmem:[#allocation2 + $0x9c8] sm:$0xff]
        %v497 = vld [vmem:[#allocation2 + $0x9d0] sm:$0xff]
        %v498 = vld [vmem:[#allocation2 + $0x9d8] sm:$0xff]
        %v499 = vld [vmem:[#allocation2 + $0x9e0] sm:$0xff]
        %v500 = vld [vmem:[#allocation2 + $0x9e8] sm:$0xff]
        %v501 = vld [vmem:[#allocation2 + $0x9f0] sm:$0xff]
        %v502 = vld [vmem:[#allocation2 + $0x9f8] sm:$0xff]
        %v503 = vld [vmem:[#allocation2 + $0xa00] sm:$0xff]
        %v504 = vld [vmem:[#allocation2 + $0xa08] sm:$0xff]
        %v505 = vld [vmem:[#allocation2 + $0xa10] sm:$0xff]
        %v506 = vld [vmem:[#allocation2 + $0xa18] sm:$0xff]
        %v507 = vld [vmem:[#allocation2 + $0xa20] sm:$0xff]
        %v508 = vld [vmem:[#allocation2 + $0xa28] sm:$0xff]
        %v509 = vld [vmem:[#allocation2 + $0xa30] sm:$0xff]
        %v510 = vld [vmem:[#allocation2 + $0xa38] sm:$0xff]
        %v511 = vld [vmem:[#allocation2 + $0xa40] sm:$0xff]
        %v512 = vld [vmem:[#allocation2 + $0xa48] sm:$0xff]
        %v513 = vld [vmem:[#allocation2 + $0xa50] sm:$0xff]
        %v514 = vld [vmem:[#allocation2 + $0xa58] sm:$0xff]
        %v515 = vld [vmem:[#allocation2 + $0xa60] sm:$0xff]
        %v516 = vld [vmem:[#allocation2 + $0xa68] sm:$0xff]
        %v517 = vld [vmem:[#allocation2 + $0xa70] sm:$0xff]
        %v518 = vld [vmem:[#allocation2 + $0xa78] sm:$0xff]
        %v519 = vld [vmem:[#allocation2 + $0xa80] sm:$0xff]
        %v520 = vld [vmem:[#allocation2 + $0xa88] sm:$0xff]
        %v521 = vld [vmem:[#allocation2 + $0xa90] sm:$0xff]
        %v522 = vld [vmem:[#allocation2 + $0xa98] sm:$0xff]
        %v523 = vld [vmem:[#allocation2 + $0xaa0] sm:$0xff]
        %v524 = vld [vmem:[#allocation2 + $0xaa8] sm:$0xff]
        %v525 = vld [vmem:[#allocation2 + $0xab0] sm:$0xff]
        %v526 = vld [vmem:[#allocation2 + $0xab8] sm:$0xff]
        %v527 = vld [vmem:[#allocation2 + $0xac0] sm:$0xff]
        %v528 = vld [vmem:[#allocation2 + $0xac8] sm:$0xff]
        %v529 = vld [vmem:[#allocation2 + $0xad0] sm:$0xff]
        %v530 = vld [vmem:[#allocation2 + $0xad8] sm:$0xff]
        %v531 = vld [vmem:[#allocation2 + $0xae0] sm:$0xff]
        %v532 = vld [vmem:[#allocation2 + $0xae8] sm:$0xff]
        %v533 = vld [vmem:[#allocation2 + $0xaf0] sm:$0xff]
        %v534 = vld [vmem:[#allocation2 + $0xaf8] sm:$0xff]
        %v535 = vld [vmem:[#allocation2 + $0xb00] sm:$0xff]
        %v536 = vld [vmem:[#allocation2 + $0xb08] sm:$0xff]
        %v537 = vld [vmem:[#allocation2 + $0xb10] sm:$0xff]
        %v538 = vld [vmem:[#allocation2 + $0xb18] sm:$0xff]
        %v539 = vld [vmem:[#allocation2 + $0xb20] sm:$0xff]
        %v540 = vld [vmem:[#allocation2 + $0xb28] sm:$0xff]
        %v541 = vld [vmem:[#allocation2 + $0xb30] sm:$0xff]
        %v542 = vld [vmem:[#allocation2 + $0xb38] sm:$0xff]
        %v543 = vld [vmem:[#allocation2 + $0xb40] sm:$0xff]
        %v544 = vld [vmem:[#allocation2 + $0xb48] sm:$0xff]
        %v545 = vld [vmem:[#allocation2 + $0xb50] sm:$0xff]
        %v546 = vld [vmem:[#allocation2 + $0xb58] sm:$0xff]
        %v547 = vld [vmem:[#allocation2 + $0xb60] sm:$0xff]
        %v548 = vld [vmem:[#allocation2 + $0xb68] sm:$0xff]
        %v549 = vld [vmem:[#allocation2 + $0xb70] sm:$0xff]
        %v550 = vld [vmem:[#allocation2 + $0xb78] sm:$0xff]
        %v551 = vld [vmem:[#allocation2 + $0xb80] sm:$0xff]
        %v552 = vld [vmem:[#allocation2 + $0xb88] sm:$0xff]
        %v553 = vld [vmem:[#allocation2 + $0xb90] sm:$0xff]
        %v554 = vld [vmem:[#allocation2 + $0xb98] sm:$0xff]
        %v555 = vld [vmem:[#allocation2 + $0xba0] sm:$0xff]
        %v556 = vld [vmem:[#allocation2 + $0xba8] sm:$0xff]
        %v557 = vld [vmem:[#allocation2 + $0xbb0] sm:$0xff]
        %v558 = vld [vmem:[#allocation2 + $0xbb8] sm:$0xff]
        %v559 = vld [vmem:[#allocation2 + $0xbc0] sm:$0xff]
        %v560 = vld [vmem:[#allocation2 + $0xbc8] sm:$0xff]
        %v561 = vld [vmem:[#allocation2 + $0xbd0] sm:$0xff]
        %v562 = vld [vmem:[#allocation2 + $0xbd8] sm:$0xff]
        %v563 = vld [vmem:[#allocation2 + $0xbe0] sm:$0xff]
        %v564 = vld [vmem:[#allocation2 + $0xbe8] sm:$0xff]
        %v565 = vld [vmem:[#allocation2 + $0xbf0] sm:$0xff]
        %v566 = vld [vmem:[#allocation2 + $0xbf8] sm:$0xff]
        %v567 = vld [vmem:[#allocation2 + $0xc00] sm:$0xff]
        %v568 = vld [vmem:[#allocation2 + $0xc08] sm:$0xff]
        %v569 = vld [vmem:[#allocation2 + $0xc10] sm:$0xff]
        %v570 = vld [vmem:[#allocation2 + $0xc18] sm:$0xff]
        %v571 = vld [vmem:[#allocation2 + $0xc20] sm:$0xff]
        %v572 = vld [vmem:[#allocation2 + $0xc28] sm:$0xff]
        %v573 = vld [vmem:[#allocation2 + $0xc30] sm:$0xff]
        %v574 = vld [vmem:[#allocation2 + $0xc38] sm:$0xff]
        %v575 = vld [vmem:[#allocation2 + $0xc40] sm:$0xff]
        %v576 = vld [vmem:[#allocation2 + $0xc48] sm:$0xff]
        %v577 = vld [vmem:[#allocation2 + $0xc50] sm:$0xff]
        %v578 = vld [vmem:[#allocation2 + $0xc58] sm:$0xff]
        %v579 = vld [vmem:[#allocation2 + $0xc60] sm:$0xff]
        %v580 = vld [vmem:[#allocation2 + $0xc68] sm:$0xff]
        %v581 = vld [vmem:[#allocation2 + $0xc70] sm:$0xff]
        %v582 = vld [vmem:[#allocation2 + $0xc78] sm:$0xff]
        %v583 = vld [vmem:[#allocation2 + $0xc80] sm:$0xff]
        %v584 = vld [vmem:[#allocation2 + $0xc88] sm:$0xff]
        %v585 = vld [vmem:[#allocation2 + $0xc90] sm:$0xff]
        %v586 = vld [vmem:[#allocation2 + $0xc98] sm:$0xff]
        %v587 = vld [vmem:[#allocation2 + $0xca0] sm:$0xff]
        %v588 = vld [vmem:[#allocation2 + $0xca8] sm:$0xff]
        %v589 = vld [vmem:[#allocation2 + $0xcb0] sm:$0xff]
        %v590 = vld [vmem:[#allocation2 + $0xcb8] sm:$0xff]
        %v591 = vld [vmem:[#allocation2 + $0xcc0] sm:$0xff]
        %v592 = vld [vmem:[#allocation2 + $0xcc8] sm:$0xff]
        %v593 = vld [vmem:[#allocation2 + $0xcd0] sm:$0xff]
        %v594 = vld [vmem:[#allocation2 + $0xcd8] sm:$0xff]
        %v595 = vld [vmem:[#allocation2 + $0xce0] sm:$0xff]
        %v596 = vld [vmem:[#allocation2 + $0xce8] sm:$0xff]
        %v597 = vld [vmem:[#allocation2 + $0xcf0] sm:$0xff]
        %v598 = vld [vmem:[#allocation2 + $0xcf8] sm:$0xff]
        %v599 = vld [vmem:[#allocation2 + $0xd00] sm:$0xff]
        %v600 = vld [vmem:[#allocation2 + $0xd08] sm:$0xff]
        %v601 = vld [vmem:[#allocation2 + $0xd10] sm:$0xff]
        %v602 = vld [vmem:[#allocation2 + $0xd18] sm:$0xff]
        %v603 = vld [vmem:[#allocation2 + $0xd20] sm:$0xff]
        %v604 = vld [vmem:[#allocation2 + $0xd28] sm:$0xff]
        %v605 = vld [vmem:[#allocation2 + $0xd30] sm:$0xff]
        %v606 = vld [vmem:[#allocation2 + $0xd38] sm:$0xff]
        %v607 = vld [vmem:[#allocation2 + $0xd40] sm:$0xff]
        %v608 = vld [vmem:[#allocation2 + $0xd48] sm:$0xff]
        %v609 = vld [vmem:[#allocation2 + $0xd50] sm:$0xff]
        %v610 = vld [vmem:[#allocation2 + $0xd58] sm:$0xff]
        %v611 = vld [vmem:[#allocation2 + $0xd60] sm:$0xff]
        %v612 = vld [vmem:[#allocation2 + $0xd68] sm:$0xff]
        %v613 = vld [vmem:[#allocation2 + $0xd70] sm:$0xff]
        %v614 = vld [vmem:[#allocation2 + $0xd78] sm:$0xff]
        %v615 = vld [vmem:[#allocation2 + $0xd80] sm:$0xff]
        %v616 = vld [vmem:[#allocation2 + $0xd88] sm:$0xff]
        %v617 = vld [vmem:[#allocation2 + $0xd90] sm:$0xff]
        %v618 = vld [vmem:[#allocation2 + $0xd98] sm:$0xff]
        %v619 = vld [vmem:[#allocation2 + $0xda0] sm:$0xff]
        %v620 = vld [vmem:[#allocation2 + $0xda8] sm:$0xff]
        %v621 = vld [vmem:[#allocation2 + $0xdb0] sm:$0xff]
        %v622 = vld [vmem:[#allocation2 + $0xdb8] sm:$0xff]
        %v623 = vld [vmem:[#allocation2 + $0xdc0] sm:$0xff]
        %v624 = vld [vmem:[#allocation2 + $0xdc8] sm:$0xff]
        %v625 = vld [vmem:[#allocation2 + $0xdd0] sm:$0xff]
        %v626 = vld [vmem:[#allocation2 + $0xdd8] sm:$0xff]
        %v627 = vld [vmem:[#allocation2 + $0xde0] sm:$0xff]
        %v628 = vld [vmem:[#allocation2 + $0xde8] sm:$0xff]
        %v629 = vld [vmem:[#allocation2 + $0xdf0] sm:$0xff]
        %v630 = vld [vmem:[#allocation2 + $0xdf8] sm:$0xff]
        %v631 = vld [vmem:[#allocation2 + $0xe00] sm:$0xff]
        %v632 = vld [vmem:[#allocation2 + $0xe08] sm:$0xff]
        %v633 = vld [vmem:[#allocation2 + $0xe10] sm:$0xff]
        %v634 = vld [vmem:[#allocation2 + $0xe18] sm:$0xff]
        %v635 = vld [vmem:[#allocation2 + $0xe20] sm:$0xff]
        %v636 = vld [vmem:[#allocation2 + $0xe28] sm:$0xff]
        %v637 = vld [vmem:[#allocation2 + $0xe30] sm:$0xff]
        %v638 = vld [vmem:[#allocation2 + $0xe38] sm:$0xff]
        %v639 = vld [vmem:[#allocation2 + $0xe40] sm:$0xff]
        %v640 = vld [vmem:[#allocation2 + $0xe48] sm:$0xff]
        %v641 = vld [vmem:[#allocation2 + $0xe50] sm:$0xff]
        %v642 = vld [vmem:[#allocation2 + $0xe58] sm:$0xff]
        %v643 = vld [vmem:[#allocation2 + $0xe60] sm:$0xff]
        %v644 = vld [vmem:[#allocation2 + $0xe68] sm:$0xff]
        %v645 = vld [vmem:[#allocation2 + $0xe70] sm:$0xff]
        %v646 = vld [vmem:[#allocation2 + $0xe78] sm:$0xff]
        %v647 = vld [vmem:[#allocation2 + $0xe80] sm:$0xff]
        %v648 = vld [vmem:[#allocation2 + $0xe88] sm:$0xff]
        %v649 = vld [vmem:[#allocation2 + $0xe90] sm:$0xff]
        %v650 = vld [vmem:[#allocation2 + $0xe98] sm:$0xff]
        %v651 = vld [vmem:[#allocation2 + $0xea0] sm:$0xff]
        %v652 = vld [vmem:[#allocation2 + $0xea8] sm:$0xff]
        %v653 = vld [vmem:[#allocation2 + $0xeb0] sm:$0xff]
        %v654 = vld [vmem:[#allocation2 + $0xeb8] sm:$0xff]
        %v655 = vld [vmem:[#allocation2 + $0xec0] sm:$0xff]
        %v656 = vld [vmem:[#allocation2 + $0xec8] sm:$0xff]
        %v657 = vld [vmem:[#allocation2 + $0xed0] sm:$0xff]
        %v658 = vld [vmem:[#allocation2 + $0xed8] sm:$0xff]
        %v659 = vld [vmem:[#allocation2 + $0xee0] sm:$0xff]
        %v660 = vld [vmem:[#allocation2 + $0xee8] sm:$0xff]
        %v661 = vld [vmem:[#allocation2 + $0xef0] sm:$0xff]
        %v662 = vld [vmem:[#allocation2 + $0xef8] sm:$0xff]
        %v663 = vld [vmem:[#allocation2 + $0xf00] sm:$0xff]
        %v664 = vld [vmem:[#allocation2 + $0xf08] sm:$0xff]
        %v665 = vld [vmem:[#allocation2 + $0xf10] sm:$0xff]
        %v666 = vld [vmem:[#allocation2 + $0xf18] sm:$0xff]
        %v667 = vld [vmem:[#allocation2 + $0xf20] sm:$0xff]
        %v668 = vld [vmem:[#allocation2 + $0xf28] sm:$0xff]
        %v669 = vld [vmem:[#allocation2 + $0xf30] sm:$0xff]
        %v670 = vld [vmem:[#allocation2 + $0xf38] sm:$0xff]
        %v671 = vld [vmem:[#allocation2 + $0xf40] sm:$0xff]
        %v672 = vld [vmem:[#allocation2 + $0xf48] sm:$0xff]
        %v673 = vld [vmem:[#allocation2 + $0xf50] sm:$0xff]
        %v674 = vld [vmem:[#allocation2 + $0xf58] sm:$0xff]
        %v675 = vld [vmem:[#allocation2 + $0xf60] sm:$0xff]
        %v676 = vld [vmem:[#allocation2 + $0xf68] sm:$0xff]
        %v677 = vld [vmem:[#allocation2 + $0xf70] sm:$0xff]
        %v678 = vld [vmem:[#allocation2 + $0xf78] sm:$0xff]
        %v679 = vld [vmem:[#allocation2 + $0xf80] sm:$0xff]
        %v680 = vld [vmem:[#allocation2 + $0xf88] sm:$0xff]
        %v681 = vld [vmem:[#allocation2 + $0xf90] sm:$0xff]
        %v682 = vld [vmem:[#allocation2 + $0xf98] sm:$0xff]
        %v683 = vld [vmem:[#allocation2 + $0xfa0] sm:$0xff]
        %v684 = vld [vmem:[#allocation2 + $0xfa8] sm:$0xff]
        %v685 = vld [vmem:[#allocation2 + $0xfb0] sm:$0xff]
        %v686 = vld [vmem:[#allocation2 + $0xfb8] sm:$0xff]
        %v687 = vld [vmem:[#allocation2 + $0xfc0] sm:$0xff]
        %v688 = vld [vmem:[#allocation2 + $0xfc8] sm:$0xff]
        %v689 = vld [vmem:[#allocation2 + $0xfd0] sm:$0xff]
        %v690 = vld [vmem:[#allocation2 + $0xfd8] sm:$0xff]
        %v691 = vld [vmem:[#allocation2 + $0xfe0] sm:$0xff]
        %v692 = vld [vmem:[#allocation2 + $0xfe8] sm:$0xff]
        %v693 = vld [vmem:[#allocation2 + $0xff0] sm:$0xff]
        %v694 = vld [vmem:[#allocation2 + $0xff8] sm:$0xff]
        %v695 = vld [vmem:[#allocation2 + $0x1000] sm:$0xff]
        %v696 = vld [vmem:[#allocation2 + $0x1008] sm:$0xff]
        %v697 = vld [vmem:[#allocation2 + $0x1010] sm:$0xff]
        %v698 = vld [vmem:[#allocation2 + $0x1018] sm:$0xff]
        %v699 = vld [vmem:[#allocation2 + $0x1020] sm:$0xff]
        %v700 = vld [vmem:[#allocation2 + $0x1028] sm:$0xff]
        %v701 = vld [vmem:[#allocation2 + $0x1030] sm:$0xff]
        %v702 = vld [vmem:[#allocation2 + $0x1038] sm:$0xff]
        %v703 = vld [vmem:[#allocation2 + $0x1040] sm:$0xff]
        %v704 = vld [vmem:[#allocation2 + $0x1048] sm:$0xff]
        %v705 = vld [vmem:[#allocation2 + $0x1050] sm:$0xff]
        %v706 = vld [vmem:[#allocation2 + $0x1058] sm:$0xff]
        %v707 = vld [vmem:[#allocation2 + $0x1060] sm:$0xff]
        %v708 = vld [vmem:[#allocation2 + $0x1068] sm:$0xff]
        %v709 = vld [vmem:[#allocation2 + $0x1070] sm:$0xff]
        %v710 = vld [vmem:[#allocation2 + $0x1078] sm:$0xff]
        %v711 = vld [vmem:[#allocation2 + $0x1080] sm:$0xff]
        %v712 = vld [vmem:[#allocation2 + $0x1088] sm:$0xff]
        %v713 = vld [vmem:[#allocation2 + $0x1090] sm:$0xff]
        %v714 = vld [vmem:[#allocation2 + $0x1098] sm:$0xff]
        %v715 = vld [vmem:[#allocation2 + $0x10a0] sm:$0xff]
        %v716 = vld [vmem:[#allocation2 + $0x10a8] sm:$0xff]
        %v717 = vld [vmem:[#allocation2 + $0x10b0] sm:$0xff]
        %v718 = vld [vmem:[#allocation2 + $0x10b8] sm:$0xff]
        %v719 = vld [vmem:[#allocation2 + $0x10c0] sm:$0xff]
        %v720 = vld [vmem:[#allocation2 + $0x10c8] sm:$0xff]
        %v721 = vld [vmem:[#allocation2 + $0x10d0] sm:$0xff]
        %v722 = vld [vmem:[#allocation2 + $0x10d8] sm:$0xff]
        %v723 = vld [vmem:[#allocation2 + $0x10e0] sm:$0xff]
        %v724 = vld [vmem:[#allocation2 + $0x10e8] sm:$0xff]
        %v725 = vld [vmem:[#allocation2 + $0x10f0] sm:$0xff]
        %v726 = vld [vmem:[#allocation2 + $0x10f8] sm:$0xff]
        %v727 = vld [vmem:[#allocation2 + $0x1100] sm:$0xff]
        %v728 = vld [vmem:[#allocation2 + $0x1108] sm:$0xff]
        %v729 = vld [vmem:[#allocation2 + $0x1110] sm:$0xff]
        %v730 = vld [vmem:[#allocation2 + $0x1118] sm:$0xff]
        %v731 = vld [vmem:[#allocation2 + $0x1120] sm:$0xff]
        %v732 = vld [vmem:[#allocation2 + $0x1128] sm:$0xff]
        %v733 = vld [vmem:[#allocation2 + $0x1130] sm:$0xff]
        %v734 = vld [vmem:[#allocation2 + $0x1138] sm:$0xff]
        %v735 = vld [vmem:[#allocation2 + $0x1140] sm:$0xff]
        %v736 = vld [vmem:[#allocation2 + $0x1148] sm:$0xff]
        %v737 = vld [vmem:[#allocation2 + $0x1150] sm:$0xff]
        %v738 = vld [vmem:[#allocation2 + $0x1158] sm:$0xff]
        %v739 = vld [vmem:[#allocation2 + $0x1160] sm:$0xff]
        %v740 = vld [vmem:[#allocation2 + $0x1168] sm:$0xff]
        %v741 = vld [vmem:[#allocation2 + $0x1170] sm:$0xff]
        %v742 = vld [vmem:[#allocation2 + $0x1178] sm:$0xff]
        %v743 = vld [vmem:[#allocation2 + $0x1180] sm:$0xff]
        %v744 = vld [vmem:[#allocation2 + $0x1188] sm:$0xff]
        %v745 = vld [vmem:[#allocation2 + $0x1190] sm:$0xff]
        %v746 = vld [vmem:[#allocation2 + $0x1198] sm:$0xff]
        %v747 = vld [vmem:[#allocation2 + $0x11a0] sm:$0xff]
        %v748 = vld [vmem:[#allocation2 + $0x11a8] sm:$0xff]
        %v749 = vld [vmem:[#allocation2 + $0x11b0] sm:$0xff]
        %v750 = vld [vmem:[#allocation2 + $0x11b8] sm:$0xff]
        %v751 = vld [vmem:[#allocation2 + $0x11c0] sm:$0xff]
        %v752 = vld [vmem:[#allocation2 + $0x11c8] sm:$0xff]
        %v753 = vld [vmem:[#allocation2 + $0x11d0] sm:$0xff]
        %v754 = vld [vmem:[#allocation2 + $0x11d8] sm:$0xff]
        %v755 = vld [vmem:[#allocation2 + $0x11e0] sm:$0xff]
        %v756 = vld [vmem:[#allocation2 + $0x11e8] sm:$0xff]
        %v757 = vld [vmem:[#allocation2 + $0x11f0] sm:$0xff]
        %v758 = vld [vmem:[#allocation2 + $0x11f8] sm:$0xff]
        %v759 = vld [vmem:[#allocation2 + $0x1200] sm:$0xff]
        %v760 = vld [vmem:[#allocation2 + $0x1208] sm:$0xff]
        %v761 = vld [vmem:[#allocation2 + $0x1210] sm:$0xff]
        %v762 = vld [vmem:[#allocation2 + $0x1218] sm:$0xff]
        %v763 = vld [vmem:[#allocation2 + $0x1220] sm:$0xff]
        %v764 = vld [vmem:[#allocation2 + $0x1228] sm:$0xff]
        %v765 = vld [vmem:[#allocation2 + $0x1230] sm:$0xff]
        %v766 = vld [vmem:[#allocation2 + $0x1238] sm:$0xff]
        %v767 = vld [vmem:[#allocation2 + $0x1240] sm:$0xff]
        %v768 = vld [vmem:[#allocation2 + $0x1248] sm:$0xff]
        %v769 = vld [vmem:[#allocation2 + $0x1250] sm:$0xff]
        %v770 = vld [vmem:[#allocation2 + $0x1258] sm:$0xff]
        %v771 = vld [vmem:[#allocation2 + $0x1260] sm:$0xff]
        %v772 = vld [vmem:[#allocation2 + $0x1268] sm:$0xff]
        %v773 = vld [vmem:[#allocation2 + $0x1270] sm:$0xff]
        %v774 = vld [vmem:[#allocation2 + $0x1278] sm:$0xff]
        %v775 = vld [vmem:[#allocation2 + $0x1280] sm:$0xff]
        %v776 = vld [vmem:[#allocation2 + $0x1288] sm:$0xff]
        %v777 = vld [vmem:[#allocation2 + $0x1290] sm:$0xff]
        %v778 = vld [vmem:[#allocation2 + $0x1298] sm:$0xff]
        %v779 = vld [vmem:[#allocation2 + $0x12a0] sm:$0xff]
        %v780 = vld [vmem:[#allocation2 + $0x12a8] sm:$0xff]
        %v781 = vld [vmem:[#allocation2 + $0x12b0] sm:$0xff]
        %v782 = vld [vmem:[#allocation2 + $0x12b8] sm:$0xff]
        %v783 = vld [vmem:[#allocation2 + $0x12c0] sm:$0xff]
        %v784 = vld [vmem:[#allocation2 + $0x12c8] sm:$0xff]
        %v785 = vld [vmem:[#allocation2 + $0x12d0] sm:$0xff]
        %v786 = vld [vmem:[#allocation2 + $0x12d8] sm:$0xff]
        %v787 = vld [vmem:[#allocation2 + $0x12e0] sm:$0xff]
        %v788 = vld [vmem:[#allocation2 + $0x12e8] sm:$0xff]
        %v789 = vld [vmem:[#allocation2 + $0x12f0] sm:$0xff]
        %v790 = vld [vmem:[#allocation2 + $0x12f8] sm:$0xff]
        %v791 = vld [vmem:[#allocation2 + $0x1300] sm:$0xff]
        %v792 = vld [vmem:[#allocation2 + $0x1308] sm:$0xff]
        %v793 = vld [vmem:[#allocation2 + $0x1310] sm:$0xff]
        %v794 = vld [vmem:[#allocation2 + $0x1318] sm:$0xff]
        %v795 = vld [vmem:[#allocation2 + $0x1320] sm:$0xff]
        %v796 = vld [vmem:[#allocation2 + $0x1328] sm:$0xff]
        %v797 = vld [vmem:[#allocation2 + $0x1330] sm:$0xff]
        %v798 = vld [vmem:[#allocation2 + $0x1338] sm:$0xff]
        %v799 = vld [vmem:[#allocation2 + $0x1340] sm:$0xff]
        %v800 = vld [vmem:[#allocation2 + $0x1348] sm:$0xff]
        %v801 = vld [vmem:[#allocation2 + $0x1350] sm:$0xff]
        %v802 = vld [vmem:[#allocation2 + $0x1358] sm:$0xff]
        %v803 = vld [vmem:[#allocation2 + $0x1360] sm:$0xff]
        %v804 = vld [vmem:[#allocation2 + $0x1368] sm:$0xff]
        %v805 = vld [vmem:[#allocation2 + $0x1370] sm:$0xff]
        %v806 = vld [vmem:[#allocation2 + $0x1378] sm:$0xff]
        %v807 = vld [vmem:[#allocation2 + $0x1380] sm:$0xff]
        %v808 = vld [vmem:[#allocation2 + $0x1388] sm:$0xff]
        %v809 = vld [vmem:[#allocation2 + $0x1390] sm:$0xff]
        %v810 = vld [vmem:[#allocation2 + $0x1398] sm:$0xff]
        %v811 = vld [vmem:[#allocation2 + $0x13a0] sm:$0xff]
        %v812 = vld [vmem:[#allocation2 + $0x13a8] sm:$0xff]
        %v813 = vld [vmem:[#allocation2 + $0x13b0] sm:$0xff]
        %v814 = vld [vmem:[#allocation2 + $0x13b8] sm:$0xff]
        %v815 = vld [vmem:[#allocation2 + $0x13c0] sm:$0xff]
        %v816 = vld [vmem:[#allocation2 + $0x13c8] sm:$0xff]
        %v817 = vld [vmem:[#allocation2 + $0x13d0] sm:$0xff]
        %v818 = vld [vmem:[#allocation2 + $0x13d8] sm:$0xff]
        %v819 = vld [vmem:[#allocation2 + $0x13e0] sm:$0xff]
        %v820 = vld [vmem:[#allocation2 + $0x13e8] sm:$0xff]
        %v821 = vld [vmem:[#allocation2 + $0x13f0] sm:$0xff]
        %v822 = vld [vmem:[#allocation2 + $0x13f8] sm:$0xff]
        %v823 = vld [vmem:[#allocation2 + $0x1400] sm:$0xff]
        %v824 = vld [vmem:[#allocation2 + $0x1408] sm:$0xff]
        %v825 = vld [vmem:[#allocation2 + $0x1410] sm:$0xff]
        %v826 = vld [vmem:[#allocation2 + $0x1418] sm:$0xff]
        %v827 = vld [vmem:[#allocation2 + $0x1420] sm:$0xff]
        %v828 = vld [vmem:[#allocation2 + $0x1428] sm:$0xff]
        %v829 = vld [vmem:[#allocation2 + $0x1430] sm:$0xff]
        %v830 = vld [vmem:[#allocation2 + $0x1438] sm:$0xff]
        %v831 = vld [vmem:[#allocation2 + $0x1440] sm:$0xff]
        %v832 = vld [vmem:[#allocation2 + $0x1448] sm:$0xff]
        %v833 = vld [vmem:[#allocation2 + $0x1450] sm:$0xff]
        %v834 = vld [vmem:[#allocation2 + $0x1458] sm:$0xff]
        %v835 = vld [vmem:[#allocation2 + $0x1460] sm:$0xff]
        %v836 = vld [vmem:[#allocation2 + $0x1468] sm:$0xff]
        %v837 = vld [vmem:[#allocation2 + $0x1470] sm:$0xff]
        %v838 = vld [vmem:[#allocation2 + $0x1478] sm:$0xff]
        %v839 = vld [vmem:[#allocation2 + $0x1480] sm:$0xff]
        %v840 = vld [vmem:[#allocation2 + $0x1488] sm:$0xff]
        %v841 = vld [vmem:[#allocation2 + $0x1490] sm:$0xff]
        %v842 = vld [vmem:[#allocation2 + $0x1498] sm:$0xff]
        %v843 = vld [vmem:[#allocation2 + $0x14a0] sm:$0xff]
        %v844 = vld [vmem:[#allocation2 + $0x14a8] sm:$0xff]
        %v845 = vld [vmem:[#allocation2 + $0x14b0] sm:$0xff]
        %v846 = vld [vmem:[#allocation2 + $0x14b8] sm:$0xff]
        %v847 = vld [vmem:[#allocation2 + $0x14c0] sm:$0xff]
        %v848 = vld [vmem:[#allocation2 + $0x14c8] sm:$0xff]
        %v849 = vld [vmem:[#allocation2 + $0x14d0] sm:$0xff]
        %v850 = vld [vmem:[#allocation2 + $0x14d8] sm:$0xff]
        %v851 = vld [vmem:[#allocation2 + $0x14e0] sm:$0xff]
        %v852 = vld [vmem:[#allocation2 + $0x14e8] sm:$0xff]
        %v853 = vld [vmem:[#allocation2 + $0x14f0] sm:$0xff]
        %v854 = vld [vmem:[#allocation2 + $0x14f8] sm:$0xff]
        %v855 = vld [vmem:[#allocation2 + $0x1500] sm:$0xff]
        %v856 = vld [vmem:[#allocation2 + $0x1508] sm:$0xff]
        %v857 = vld [vmem:[#allocation2 + $0x1510] sm:$0xff]
        %v858 = vld [vmem:[#allocation2 + $0x1518] sm:$0xff]
        %v859 = vld [vmem:[#allocation2 + $0x1520] sm:$0xff]
        %v860 = vld [vmem:[#allocation2 + $0x1528] sm:$0xff]
        %v861 = vld [vmem:[#allocation2 + $0x1530] sm:$0xff]
        %v862 = vld [vmem:[#allocation2 + $0x1538] sm:$0xff]
        %v863 = vld [vmem:[#allocation2 + $0x1540] sm:$0xff]
        %v864 = vld [vmem:[#allocation2 + $0x1548] sm:$0xff]
        %v865 = vld [vmem:[#allocation2 + $0x1550] sm:$0xff]
        %v866 = vld [vmem:[#allocation2 + $0x1558] sm:$0xff]
        %v867 = vld [vmem:[#allocation2 + $0x1560] sm:$0xff]
        %v868 = vld [vmem:[#allocation2 + $0x1568] sm:$0xff]
        %v869 = vld [vmem:[#allocation2 + $0x1570] sm:$0xff]
        %v870 = vld [vmem:[#allocation2 + $0x1578] sm:$0xff]
        %v871 = vld [vmem:[#allocation2 + $0x1580] sm:$0xff]
        %v872 = vld [vmem:[#allocation2 + $0x1588] sm:$0xff]
        %v873 = vld [vmem:[#allocation2 + $0x1590] sm:$0xff]
        %v874 = vld [vmem:[#allocation2 + $0x1598] sm:$0xff]
        %v875 = vld [vmem:[#allocation2 + $0x15a0] sm:$0xff]
        %v876 = vld [vmem:[#allocation2 + $0x15a8] sm:$0xff]
        %v877 = vld [vmem:[#allocation2 + $0x15b0] sm:$0xff]
        %v878 = vld [vmem:[#allocation2 + $0x15b8] sm:$0xff]
        %v879 = vld [vmem:[#allocation2 + $0x15c0] sm:$0xff]
        %v880 = vld [vmem:[#allocation2 + $0x15c8] sm:$0xff]
        %v881 = vld [vmem:[#allocation2 + $0x15d0] sm:$0xff]
        %v882 = vld [vmem:[#allocation2 + $0x15d8] sm:$0xff]
        %v883 = vld [vmem:[#allocation2 + $0x15e0] sm:$0xff]
        %v884 = vld [vmem:[#allocation2 + $0x15e8] sm:$0xff]
        %v885 = vld [vmem:[#allocation2 + $0x15f0] sm:$0xff]
        %v886 = vld [vmem:[#allocation2 + $0x15f8] sm:$0xff]
        %v887 = vld [vmem:[#allocation2 + $0x1600] sm:$0xff]
        %v888 = vld [vmem:[#allocation2 + $0x1608] sm:$0xff]
        %v889 = vld [vmem:[#allocation2 + $0x1610] sm:$0xff]
        %v890 = vld [vmem:[#allocation2 + $0x1618] sm:$0xff]
        %v891 = vld [vmem:[#allocation2 + $0x1620] sm:$0xff]
        %v892 = vld [vmem:[#allocation2 + $0x1628] sm:$0xff]
        %v893 = vld [vmem:[#allocation2 + $0x1630] sm:$0xff]
        %v894 = vld [vmem:[#allocation2 + $0x1638] sm:$0xff]
        %v895 = vld [vmem:[#allocation2 + $0x1640] sm:$0xff]
        %v896 = vld [vmem:[#allocation2 + $0x1648] sm:$0xff]
        %v897 = vld [vmem:[#allocation2 + $0x1650] sm:$0xff]
        %v898 = vld [vmem:[#allocation2 + $0x1658] sm:$0xff]
        %v899 = vld [vmem:[#allocation2 + $0x1660] sm:$0xff]
        %v900 = vld [vmem:[#allocation2 + $0x1668] sm:$0xff]
        %v901 = vld [vmem:[#allocation2 + $0x1670] sm:$0xff]
        %v902 = vld [vmem:[#allocation2 + $0x1678] sm:$0xff]
        %v903 = vld [vmem:[#allocation2 + $0x1680] sm:$0xff]
        %v904 = vld [vmem:[#allocation2 + $0x1688] sm:$0xff]
        %v905 = vld [vmem:[#allocation2 + $0x1690] sm:$0xff]
        %v906 = vld [vmem:[#allocation2 + $0x1698] sm:$0xff]
        %v907 = vld [vmem:[#allocation2 + $0x16a0] sm:$0xff]
        %v908 = vld [vmem:[#allocation2 + $0x16a8] sm:$0xff]
        %v909 = vld [vmem:[#allocation2 + $0x16b0] sm:$0xff]
        %v910 = vld [vmem:[#allocation2 + $0x16b8] sm:$0xff]
        %v911 = vld [vmem:[#allocation2 + $0x16c0] sm:$0xff]
        %v912 = vld [vmem:[#allocation2 + $0x16c8] sm:$0xff]
        %v913 = vld [vmem:[#allocation2 + $0x16d0] sm:$0xff]
        %v914 = vld [vmem:[#allocation2 + $0x16d8] sm:$0xff]
        %v915 = vld [vmem:[#allocation2 + $0x16e0] sm:$0xff]
        %v916 = vld [vmem:[#allocation2 + $0x16e8] sm:$0xff]
        %v917 = vld [vmem:[#allocation2 + $0x16f0] sm:$0xff]
        %v918 = vld [vmem:[#allocation2 + $0x16f8] sm:$0xff]
        %v919 = vld [vmem:[#allocation2 + $0x1700] sm:$0xff]
        %v920 = vld [vmem:[#allocation2 + $0x1708] sm:$0xff]
        %v921 = vld [vmem:[#allocation2 + $0x1710] sm:$0xff]
        %v922 = vld [vmem:[#allocation2 + $0x1718] sm:$0xff]
        %v923 = vld [vmem:[#allocation2 + $0x1720] sm:$0xff]
        %v924 = vld [vmem:[#allocation2 + $0x1728] sm:$0xff]
        %v925 = vld [vmem:[#allocation2 + $0x1730] sm:$0xff]
        %v926 = vld [vmem:[#allocation2 + $0x1738] sm:$0xff]
        %v927 = vld [vmem:[#allocation2 + $0x1740] sm:$0xff]
        %v928 = vld [vmem:[#allocation2 + $0x1748] sm:$0xff]
        %v929 = vld [vmem:[#allocation2 + $0x1750] sm:$0xff]
        %v930 = vld [vmem:[#allocation2 + $0x1758] sm:$0xff]
        %v931 = vld [vmem:[#allocation2 + $0x1760] sm:$0xff]
        %v932 = vld [vmem:[#allocation2 + $0x1768] sm:$0xff]
        %v933 = vld [vmem:[#allocation2 + $0x1770] sm:$0xff]
        %v934 = vld [vmem:[#allocation2 + $0x1778] sm:$0xff]
        %v935 = vld [vmem:[#allocation2 + $0x1780] sm:$0xff]
        %v936 = vld [vmem:[#allocation2 + $0x1788] sm:$0xff]
        %v937 = vld [vmem:[#allocation2 + $0x1790] sm:$0xff]
        %v938 = vld [vmem:[#allocation2 + $0x1798] sm:$0xff]
        %v939 = vld [vmem:[#allocation2 + $0x17a0] sm:$0xff]
        %v940 = vld [vmem:[#allocation2 + $0x17a8] sm:$0xff]
        %v941 = vld [vmem:[#allocation2 + $0x17b0] sm:$0xff]
        %v942 = vld [vmem:[#allocation2 + $0x17b8] sm:$0xff]
        %v943 = vld [vmem:[#allocation2 + $0x17c0] sm:$0xff]
        %v944 = vld [vmem:[#allocation2 + $0x17c8] sm:$0xff]
        %v945 = vld [vmem:[#allocation2 + $0x17d0] sm:$0xff]
        %v946 = vld [vmem:[#allocation2 + $0x17d8] sm:$0xff]
        %v947 = vld [vmem:[#allocation2 + $0x17e0] sm:$0xff]
        %v948 = vld [vmem:[#allocation2 + $0x17e8] sm:$0xff]
        %v949 = vld [vmem:[#allocation2 + $0x17f0] sm:$0xff]
        %v950 = vld [vmem:[#allocation2 + $0x17f8] sm:$0xff]
        %v951 = vld [vmem:[#allocation2 + $0x1800] sm:$0xff]
        %v952 = vld [vmem:[#allocation2 + $0x1808] sm:$0xff]
        %v953 = vld [vmem:[#allocation2 + $0x1810] sm:$0xff]
        %v954 = vld [vmem:[#allocation2 + $0x1818] sm:$0xff]
        %v955 = vld [vmem:[#allocation2 + $0x1820] sm:$0xff]
        %v956 = vld [vmem:[#allocation2 + $0x1828] sm:$0xff]
        %v957 = vld [vmem:[#allocation2 + $0x1830] sm:$0xff]
        %v958 = vld [vmem:[#allocation2 + $0x1838] sm:$0xff]
        %v959 = vld [vmem:[#allocation2 + $0x1840] sm:$0xff]
        %v960 = vld [vmem:[#allocation2 + $0x1848] sm:$0xff]
        %v961 = vld [vmem:[#allocation2 + $0x1850] sm:$0xff]
        %v962 = vld [vmem:[#allocation2 + $0x1858] sm:$0xff]
        %v963 = vld [vmem:[#allocation2 + $0x1860] sm:$0xff]
        %v964 = vld [vmem:[#allocation2 + $0x1868] sm:$0xff]
        %v965 = vld [vmem:[#allocation2 + $0x1870] sm:$0xff]
        %v966 = vld [vmem:[#allocation2 + $0x1878] sm:$0xff]
        %v967 = vld [vmem:[#allocation2 + $0x1880] sm:$0xff]
        %v968 = vld [vmem:[#allocation2 + $0x1888] sm:$0xff]
        %v969 = vld [vmem:[#allocation2 + $0x1890] sm:$0xff]
        %v970 = vld [vmem:[#allocation2 + $0x1898] sm:$0xff]
        %v971 = vld [vmem:[#allocation2 + $0x18a0] sm:$0xff]
        %v972 = vld [vmem:[#allocation2 + $0x18a8] sm:$0xff]
        %v973 = vld [vmem:[#allocation2 + $0x18b0] sm:$0xff]
        %v974 = vld [vmem:[#allocation2 + $0x18b8] sm:$0xff]
        %v975 = vld [vmem:[#allocation2 + $0x18c0] sm:$0xff]
        %v976 = vld [vmem:[#allocation2 + $0x18c8] sm:$0xff]
        %v977 = vld [vmem:[#allocation2 + $0x18d0] sm:$0xff]
        %v978 = vld [vmem:[#allocation2 + $0x18d8] sm:$0xff]
        %v979 = vld [vmem:[#allocation2 + $0x18e0] sm:$0xff]
        %v980 = vld [vmem:[#allocation2 + $0x18e8] sm:$0xff]
        %v981 = vld [vmem:[#allocation2 + $0x18f0] sm:$0xff]
        %v982 = vld [vmem:[#allocation2 + $0x18f8] sm:$0xff]
        %v983 = vld [vmem:[#allocation2 + $0x1900] sm:$0xff]
        %v984 = vld [vmem:[#allocation2 + $0x1908] sm:$0xff]
        %v985 = vld [vmem:[#allocation2 + $0x1910] sm:$0xff]
        %v986 = vld [vmem:[#allocation2 + $0x1918] sm:$0xff]
        %v987 = vld [vmem:[#allocation2 + $0x1920] sm:$0xff]
        %v988 = vld [vmem:[#allocation2 + $0x1928] sm:$0xff]
        %v989 = vld [vmem:[#allocation2 + $0x1930] sm:$0xff]
        %v990 = vld [vmem:[#allocation2 + $0x1938] sm:$0xff]
        %v991 = vld [vmem:[#allocation2 + $0x1940] sm:$0xff]
        %v992 = vld [vmem:[#allocation2 + $0x1948] sm:$0xff]
        %v993 = vld [vmem:[#allocation2 + $0x1950] sm:$0xff]
        %v994 = vld [vmem:[#allocation2 + $0x1958] sm:$0xff]
        %v995 = vld [vmem:[#allocation2 + $0x1960] sm:$0xff]
        %v996 = vld [vmem:[#allocation2 + $0x1968] sm:$0xff]
        %v997 = vld [vmem:[#allocation2 + $0x1970] sm:$0xff]
        %v998 = vld [vmem:[#allocation2 + $0x1978] sm:$0xff]
        %v999 = vld [vmem:[#allocation2 + $0x1980] sm:$0xff]
        %v1000 = vld [vmem:[#allocation2 + $0x1988] sm:$0xff]
        %v1001 = vld [vmem:[#allocation2 + $0x1990] sm:$0xff]
        %v1002 = vld [vmem:[#allocation2 + $0x1998] sm:$0xff]
        %v1003 = vld [vmem:[#allocation2 + $0x19a0] sm:$0xff]
        %v1004 = vld [vmem:[#allocation2 + $0x19a8] sm:$0xff]
        %v1005 = vld [vmem:[#allocation2 + $0x19b0] sm:$0xff]
        %v1006 = vld [vmem:[#allocation2 + $0x19b8] sm:$0xff]
        %v1007 = vld [vmem:[#allocation2 + $0x19c0] sm:$0xff]
        %v1008 = vld [vmem:[#allocation2 + $0x19c8] sm:$0xff]
        %v1009 = vld [vmem:[#allocation2 + $0x19d0] sm:$0xff]
        %v1010 = vld [vmem:[#allocation2 + $0x19d8] sm:$0xff]
        %v1011 = vld [vmem:[#allocation2 + $0x19e0] sm:$0xff]
        %v1012 = vld [vmem:[#allocation2 + $0x19e8] sm:$0xff]
        %v1013 = vld [vmem:[#allocation2 + $0x19f0] sm:$0xff]
        %v1014 = vld [vmem:[#allocation2 + $0x19f8] sm:$0xff]
        %v1015 = vld [vmem:[#allocation2 + $0x1a00] sm:$0xff]
        %v1016 = vld [vmem:[#allocation2 + $0x1a08] sm:$0xff]
        %v1017 = vld [vmem:[#allocation2 + $0x1a10] sm:$0xff]
        %v1018 = vld [vmem:[#allocation2 + $0x1a18] sm:$0xff]
        %v1019 = vld [vmem:[#allocation2 + $0x1a20] sm:$0xff]
        %v1020 = vld [vmem:[#allocation2 + $0x1a28] sm:$0xff]
        %v1021 = vld [vmem:[#allocation2 + $0x1a30] sm:$0xff]
        %v1022 = vld [vmem:[#allocation2 + $0x1a38] sm:$0xff]
        %v1023 = vld [vmem:[#allocation2 + $0x1a40] sm:$0xff]
        %v1024 = vld [vmem:[#allocation2 + $0x1a48] sm:$0xff]
        %v1025 = vld [vmem:[#allocation2 + $0x1a50] sm:$0xff]
        %v1026 = vld [vmem:[#allocation2 + $0x1a58] sm:$0xff]
        %v1027 = vld [vmem:[#allocation2 + $0x1a60] sm:$0xff]
        %v1028 = vld [vmem:[#allocation2 + $0x1a68] sm:$0xff]
        %v1029 = vld [vmem:[#allocation2 + $0x1a70] sm:$0xff]
        %v1030 = vld [vmem:[#allocation2 + $0x1a78] sm:$0xff]
        %v1031 = vld [vmem:[#allocation2 + $0x1a80] sm:$0xff]
        %v1032 = vld [vmem:[#allocation2 + $0x1a88] sm:$0xff]
        %v1033 = vld [vmem:[#allocation2 + $0x1a90] sm:$0xff]
        %v1034 = vld [vmem:[#allocation2 + $0x1a98] sm:$0xff]
        %v1035 = vld [vmem:[#allocation2 + $0x1aa0] sm:$0xff]
        %v1036 = vld [vmem:[#allocation2 + $0x1aa8] sm:$0xff]
        %v1037 = vld [vmem:[#allocation2 + $0x1ab0] sm:$0xff]
        %v1038 = vld [vmem:[#allocation2 + $0x1ab8] sm:$0xff]
        %v1039 = vld [vmem:[#allocation2 + $0x1ac0] sm:$0xff]
        %v1040 = vld [vmem:[#allocation2 + $0x1ac8] sm:$0xff]
        %v1041 = vld [vmem:[#allocation2 + $0x1ad0] sm:$0xff]
        %v1042 = vld [vmem:[#allocation2 + $0x1ad8] sm:$0xff]
        %v1043 = vld [vmem:[#allocation2 + $0x1ae0] sm:$0xff]
        %v1044 = vld [vmem:[#allocation2 + $0x1ae8] sm:$0xff]
        %v1045 = vld [vmem:[#allocation2 + $0x1af0] sm:$0xff]
        %v1046 = vld [vmem:[#allocation2 + $0x1af8] sm:$0xff]
        %v1047 = vld [vmem:[#allocation2 + $0x1b00] sm:$0xff]
        %v1048 = vld [vmem:[#allocation2 + $0x1b08] sm:$0xff]
        %v1049 = vld [vmem:[#allocation2 + $0x1b10] sm:$0xff]
        %v1050 = vld [vmem:[#allocation2 + $0x1b18] sm:$0xff]
        %v1051 = vld [vmem:[#allocation2 + $0x1b20] sm:$0xff]
        %v1052 = vld [vmem:[#allocation2 + $0x1b28] sm:$0xff]
        %v1053 = vld [vmem:[#allocation2 + $0x1b30] sm:$0xff]
        %v1054 = vld [vmem:[#allocation2 + $0x1b38] sm:$0xff]
        %v1055 = vld [vmem:[#allocation2 + $0x1b40] sm:$0xff]
        %v1056 = vld [vmem:[#allocation2 + $0x1b48] sm:$0xff]
        %v1057 = vld [vmem:[#allocation2 + $0x1b50] sm:$0xff]
        %v1058 = vld [vmem:[#allocation2 + $0x1b58] sm:$0xff]
        %v1059 = vld [vmem:[#allocation2 + $0x1b60] sm:$0xff]
        %v1060 = vld [vmem:[#allocation2 + $0x1b68] sm:$0xff]
        %v1061 = vld [vmem:[#allocation2 + $0x1b70] sm:$0xff]
        %v1062 = vld [vmem:[#allocation2 + $0x1b78] sm:$0xff]
        %v1063 = vld [vmem:[#allocation2 + $0x1b80] sm:$0xff]
        %v1064 = vld [vmem:[#allocation2 + $0x1b88] sm:$0xff]
        %v1065 = vld [vmem:[#allocation2 + $0x1b90] sm:$0xff]
        %v1066 = vld [vmem:[#allocation2 + $0x1b98] sm:$0xff]
        %v1067 = vld [vmem:[#allocation2 + $0x1ba0] sm:$0xff]
        %v1068 = vld [vmem:[#allocation2 + $0x1ba8] sm:$0xff]
        %v1069 = vld [vmem:[#allocation2 + $0x1bb0] sm:$0xff]
        %v1070 = vld [vmem:[#allocation2 + $0x1bb8] sm:$0xff]
        %v1071 = vld [vmem:[#allocation2 + $0x1bc0] sm:$0xff]
        %v1072 = vld [vmem:[#allocation2 + $0x1bc8] sm:$0xff]
        %v1073 = vld [vmem:[#allocation2 + $0x1bd0] sm:$0xff]
        %v1074 = vld [vmem:[#allocation2 + $0x1bd8] sm:$0xff]
        %v1075 = vld [vmem:[#allocation2 + $0x1be0] sm:$0xff]
        %v1076 = vld [vmem:[#allocation2 + $0x1be8] sm:$0xff]
        %v1077 = vld [vmem:[#allocation2 + $0x1bf0] sm:$0xff]
        %v1078 = vld [vmem:[#allocation2 + $0x1bf8] sm:$0xff]
        %v1079 = vld [vmem:[#allocation2 + $0x1c00] sm:$0xff]
        %v1080 = vld [vmem:[#allocation2 + $0x1c08] sm:$0xff]
        %v1081 = vld [vmem:[#allocation2 + $0x1c10] sm:$0xff]
        %v1082 = vld [vmem:[#allocation2 + $0x1c18] sm:$0xff]
        %v1083 = vld [vmem:[#allocation2 + $0x1c20] sm:$0xff]
        %v1084 = vld [vmem:[#allocation2 + $0x1c28] sm:$0xff]
        %v1085 = vld [vmem:[#allocation2 + $0x1c30] sm:$0xff]
        %v1086 = vld [vmem:[#allocation2 + $0x1c38] sm:$0xff]
        %v1087 = vld [vmem:[#allocation2 + $0x1c40] sm:$0xff]
        %v1088 = vld [vmem:[#allocation2 + $0x1c48] sm:$0xff]
        %v1089 = vld [vmem:[#allocation2 + $0x1c50] sm:$0xff]
        %v1090 = vld [vmem:[#allocation2 + $0x1c58] sm:$0xff]
        %v1091 = vld [vmem:[#allocation2 + $0x1c60] sm:$0xff]
        %v1092 = vld [vmem:[#allocation2 + $0x1c68] sm:$0xff]
        %v1093 = vld [vmem:[#allocation2 + $0x1c70] sm:$0xff]
        %v1094 = vld [vmem:[#allocation2 + $0x1c78] sm:$0xff]
        %v1095 = vld [vmem:[#allocation2 + $0x1c80] sm:$0xff]
        %v1096 = vld [vmem:[#allocation2 + $0x1c88] sm:$0xff]
        %v1097 = vld [vmem:[#allocation2 + $0x1c90] sm:$0xff]
        %v1098 = vld [vmem:[#allocation2 + $0x1c98] sm:$0xff]
        %v1099 = vld [vmem:[#allocation2 + $0x1ca0] sm:$0xff]
        %v1100 = vld [vmem:[#allocation2 + $0x1ca8] sm:$0xff]
        %v1101 = vld [vmem:[#allocation2 + $0x1cb0] sm:$0xff]
        %v1102 = vld [vmem:[#allocation2 + $0x1cb8] sm:$0xff]
        %v1103 = vld [vmem:[#allocation2 + $0x1cc0] sm:$0xff]
        %v1104 = vld [vmem:[#allocation2 + $0x1cc8] sm:$0xff]
        %v1105 = vld [vmem:[#allocation2 + $0x1cd0] sm:$0xff]
        %v1106 = vld [vmem:[#allocation2 + $0x1cd8] sm:$0xff]
        %v1107 = vld [vmem:[#allocation2 + $0x1ce0] sm:$0xff]
        %v1108 = vld [vmem:[#allocation2 + $0x1ce8] sm:$0xff]
        %v1109 = vld [vmem:[#allocation2 + $0x1cf0] sm:$0xff]
        %v1110 = vld [vmem:[#allocation2 + $0x1cf8] sm:$0xff]
        %v1111 = vld [vmem:[#allocation2 + $0x1d00] sm:$0xff]
        %v1112 = vld [vmem:[#allocation2 + $0x1d08] sm:$0xff]
        %v1113 = vld [vmem:[#allocation2 + $0x1d10] sm:$0xff]
        %v1114 = vld [vmem:[#allocation2 + $0x1d18] sm:$0xff]
        %v1115 = vld [vmem:[#allocation2 + $0x1d20] sm:$0xff]
        %v1116 = vld [vmem:[#allocation2 + $0x1d28] sm:$0xff]
        %v1117 = vld [vmem:[#allocation2 + $0x1d30] sm:$0xff]
        %v1118 = vld [vmem:[#allocation2 + $0x1d38] sm:$0xff]
        %v1119 = vld [vmem:[#allocation2 + $0x1d40] sm:$0xff]
        %v1120 = vld [vmem:[#allocation2 + $0x1d48] sm:$0xff]
        %v1121 = vld [vmem:[#allocation2 + $0x1d50] sm:$0xff]
        %v1122 = vld [vmem:[#allocation2 + $0x1d58] sm:$0xff]
        %v1123 = vld [vmem:[#allocation2 + $0x1d60] sm:$0xff]
        %v1124 = vld [vmem:[#allocation2 + $0x1d68] sm:$0xff]
        %v1125 = vld [vmem:[#allocation2 + $0x1d70] sm:$0xff]
        %v1126 = vld [vmem:[#allocation2 + $0x1d78] sm:$0xff]
        %v1127 = vld [vmem:[#allocation2 + $0x1d80] sm:$0xff]
        %v1128 = vld [vmem:[#allocation2 + $0x1d88] sm:$0xff]
        %v1129 = vld [vmem:[#allocation2 + $0x1d90] sm:$0xff]
        %v1130 = vld [vmem:[#allocation2 + $0x1d98] sm:$0xff]
        %v1131 = vld [vmem:[#allocation2 + $0x1da0] sm:$0xff]
        %v1132 = vld [vmem:[#allocation2 + $0x1da8] sm:$0xff]
        %v1133 = vld [vmem:[#allocation2 + $0x1db0] sm:$0xff]
        %v1134 = vld [vmem:[#allocation2 + $0x1db8] sm:$0xff]
        %v1135 = vld [vmem:[#allocation2 + $0x1dc0] sm:$0xff]
        %v1136 = vld [vmem:[#allocation2 + $0x1dc8] sm:$0xff]
        %v1137 = vld [vmem:[#allocation2 + $0x1dd0] sm:$0xff]
        %v1138 = vld [vmem:[#allocation2 + $0x1dd8] sm:$0xff]
        %v1139 = vld [vmem:[#allocation2 + $0x1de0] sm:$0xff]
        %v1140 = vld [vmem:[#allocation2 + $0x1de8] sm:$0xff]
        %v1141 = vld [vmem:[#allocation2 + $0x1df0] sm:$0xff]
        %v1142 = vld [vmem:[#allocation2 + $0x1df8] sm:$0xff]
        %v1143 = vld [vmem:[#allocation2 + $0x1e00] sm:$0xff]
        %v1144 = vld [vmem:[#allocation2 + $0x1e08] sm:$0xff]
        %v1145 = vld [vmem:[#allocation2 + $0x1e10] sm:$0xff]
        %v1146 = vld [vmem:[#allocation2 + $0x1e18] sm:$0xff]
        %v1147 = vld [vmem:[#allocation2 + $0x1e20] sm:$0xff]
        %v1148 = vld [vmem:[#allocation2 + $0x1e28] sm:$0xff]
        %v1149 = vld [vmem:[#allocation2 + $0x1e30] sm:$0xff]
        %v1150 = vld [vmem:[#allocation2 + $0x1e38] sm:$0xff]
        %v1151 = vld [vmem:[#allocation2 + $0x1e40] sm:$0xff]
        %v1152 = vld [vmem:[#allocation2 + $0x1e48] sm:$0xff]
        %v1153 = vld [vmem:[#allocation2 + $0x1e50] sm:$0xff]
        %v1154 = vld [vmem:[#allocation2 + $0x1e58] sm:$0xff]
        %v1155 = vld [vmem:[#allocation2 + $0x1e60] sm:$0xff]
        %v1156 = vld [vmem:[#allocation2 + $0x1e68] sm:$0xff]
        %v1157 = vld [vmem:[#allocation2 + $0x1e70] sm:$0xff]
        %v1158 = vld [vmem:[#allocation2 + $0x1e78] sm:$0xff]
        %v1159 = vld [vmem:[#allocation2 + $0x1e80] sm:$0xff]
        %v1160 = vld [vmem:[#allocation2 + $0x1e88] sm:$0xff]
        %v1161 = vld [vmem:[#allocation2 + $0x1e90] sm:$0xff]
        %v1162 = vld [vmem:[#allocation2 + $0x1e98] sm:$0xff]
        %v1163 = vld [vmem:[#allocation2 + $0x1ea0] sm:$0xff]
        %v1164 = vld [vmem:[#allocation2 + $0x1ea8] sm:$0xff]
        %v1165 = vld [vmem:[#allocation2 + $0x1eb0] sm:$0xff]
        %v1166 = vld [vmem:[#allocation2 + $0x1eb8] sm:$0xff]
        %v1167 = vld [vmem:[#allocation2 + $0x1ec0] sm:$0xff]
        %v1168 = vld [vmem:[#allocation2 + $0x1ec8] sm:$0xff]
        %v1169 = vld [vmem:[#allocation2 + $0x1ed0] sm:$0xff]
        %v1170 = vld [vmem:[#allocation2 + $0x1ed8] sm:$0xff]
        %v1171 = vld [vmem:[#allocation2 + $0x1ee0] sm:$0xff]
        %v1172 = vld [vmem:[#allocation2 + $0x1ee8] sm:$0xff]
        %v1173 = vld [vmem:[#allocation2 + $0x1ef0] sm:$0xff]
        %v1174 = vld [vmem:[#allocation2 + $0x1ef8] sm:$0xff]
        %v1175 = vld [vmem:[#allocation2 + $0x1f00] sm:$0xff]
        %v1176 = vld [vmem:[#allocation2 + $0x1f08] sm:$0xff]
        %v1177 = vld [vmem:[#allocation2 + $0x1f10] sm:$0xff]
        %v1178 = vld [vmem:[#allocation2 + $0x1f18] sm:$0xff]
        %v1179 = vld [vmem:[#allocation2 + $0x1f20] sm:$0xff]
        %v1180 = vld [vmem:[#allocation2 + $0x1f28] sm:$0xff]
        %v1181 = vld [vmem:[#allocation2 + $0x1f30] sm:$0xff]
        %v1182 = vld [vmem:[#allocation2 + $0x1f38] sm:$0xff]
        %v1183 = vld [vmem:[#allocation2 + $0x1f40] sm:$0xff]
        %v1184 = vld [vmem:[#allocation2 + $0x1f48] sm:$0xff]
        %v1185 = vld [vmem:[#allocation2 + $0x1f50] sm:$0xff]
        %v1186 = vld [vmem:[#allocation2 + $0x1f58] sm:$0xff]
        %v1187 = vld [vmem:[#allocation2 + $0x1f60] sm:$0xff]
        %v1188 = vld [vmem:[#allocation2 + $0x1f68] sm:$0xff]
        %v1189 = vld [vmem:[#allocation2 + $0x1f70] sm:$0xff]
        %v1190 = vld [vmem:[#allocation2 + $0x1f78] sm:$0xff]
        %v1191 = vld [vmem:[#allocation2 + $0x1f80] sm:$0xff]
        %v1192 = vld [vmem:[#allocation2 + $0x1f88] sm:$0xff]
        %v1193 = vld [vmem:[#allocation2 + $0x1f90] sm:$0xff]
        %v1194 = vld [vmem:[#allocation2 + $0x1f98] sm:$0xff]
        %v1195 = vld [vmem:[#allocation2 + $0x1fa0] sm:$0xff]
        %v1196 = vld [vmem:[#allocation2 + $0x1fa8] sm:$0xff]
        %v1197 = vld [vmem:[#allocation2 + $0x1fb0] sm:$0xff]
        %v1198 = vld [vmem:[#allocation2 + $0x1fb8] sm:$0xff]
        %v1199 = vld [vmem:[#allocation2 + $0x1fc0] sm:$0xff]
        %v1200 = vld [vmem:[#allocation2 + $0x1fc8] sm:$0xff]
        %v1201 = vld [vmem:[#allocation2 + $0x1fd0] sm:$0xff]
        %v1202 = vld [vmem:[#allocation2 + $0x1fd8] sm:$0xff]
        %v1203 = vld [vmem:[#allocation2 + $0x1fe0] sm:$0xff]
        %v1204 = vld [vmem:[#allocation2 + $0x1fe8] sm:$0xff]
        %v1205 = vld [vmem:[#allocation2 + $0x1ff0] sm:$0xff]
        %v1206 = vld [vmem:[#allocation2 + $0x1ff8] sm:$0xff]
        %1207 = vmatprep.subr.mxu0 %v184
        %1208 = vmatpush1.msra.mxu0 %v183
        %1209 = vmatprep.subr.mxu0 %v192
        %1210 = vmatpush1.msra.mxu0 %v191
        %1211 = vmatprep.subr.mxu0 %v200
        %1212 = vmatpush1.msra.mxu0 %v199
        %1213 = vmatprep.subr.mxu0 %v208
        %1214 = vmatpush1.msra.mxu0 %v207
        %1215 = vmatprep.subr.mxu0 %v216
        %1216 = vmatpush1.msra.mxu0 %v215
        %1217 = vmatprep.subr.mxu0 %v224
        %1218 = vmatpush1.msra.mxu0 %v223
        %1219 = vmatprep.subr.mxu0 %v232
        %1220 = vmatpush1.msra.mxu0 %v231
        %1221 = vmatprep.subr.mxu0 %v240
        %1222 = vmatpush1.msra.mxu0 %v239
        %1223 = vmatprep.subr.mxu0 %v248
        %1224 = vmatpush1.msra.mxu0 %v247
        %1225 = vmatprep.subr.mxu0 %v256
        %1226 = vmatpush1.msra.mxu0 %v255
        %1227 = vmatprep.subr.mxu0 %v264
        %1228 = vmatpush1.msra.mxu0 %v263
        %1229 = vmatprep.subr.mxu0 %v272
        %1230 = vmatpush1.msra.mxu0 %v271
        %1231 = vmatprep.subr.mxu0 %v280
        %1232 = vmatpush1.msra.mxu0 %v279
        %1233 = vmatprep.subr.mxu0 %v288
        %1234 = vmatpush1.msra.mxu0 %v287
        %1235 = vmatprep.subr.mxu0 %v296
        %1236 = vmatpush1.msra.mxu0 %v295
        %1237 = vmatprep.subr.mxu0 %v304
        %1238 = vmatpush1.msra.mxu0 %v303
        %1239 = vmatprep.subr.mxu0 %v312
        %1240 = vmatpush1.msra.mxu0 %v311
        %1241 = vmatprep.subr.mxu0 %v320
        %1242 = vmatpush1.msra.mxu0 %v319
        %1243 = vmatprep.subr.mxu0 %v328
        %1244 = vmatpush1.msra.mxu0 %v327
        %1245 = vmatprep.subr.mxu0 %v336
        %1246 = vmatpush1.msra.mxu0 %v335
        %1247 = vmatprep.subr.mxu0 %v344
        %1248 = vmatpush1.msra.mxu0 %v343
        %1249 = vmatprep.subr.mxu0 %v352
        %1250 = vmatpush1.msra.mxu0 %v351
        %1251 = vmatprep.subr.mxu0 %v360
        %1252 = vmatpush1.msra.mxu0 %v359
        %1253 = vmatprep.subr.mxu0 %v368
        %1254 = vmatpush1.msra.mxu0 %v367
        %1255 = vmatprep.subr.mxu0 %v376
        %1256 = vmatpush1.msra.mxu0 %v375
        %1257 = vmatprep.subr.mxu0 %v384
        %1258 = vmatpush1.msra.mxu0 %v383
        %1259 = vmatprep.subr.mxu0 %v392
        %1260 = vmatpush1.msra.mxu0 %v391
        %1261 = vmatprep.subr.mxu0 %v400
        %1262 = vmatpush1.msra.mxu0 %v399
        %1263 = vmatprep.subr.mxu0 %v408
        %1264 = vmatpush1.msra.mxu0 %v407
        %1265 = vmatprep.subr.mxu0 %v416
        %1266 = vmatpush1.msra.mxu0 %v415
        %1267 = vmatprep.subr.mxu0 %v424
        %1268 = vmatpush1.msra.mxu0 %v423
        %1269 = vmatprep.subr.mxu0 %v432
        %1270 = vmatpush1.msra.mxu0 %v431
        %1271 = vmatprep.mubr.f32.mxu0 %v168
        %1272 = vmatmul.mubr.f32.gmra.mrb[0].mxu0 %v167
        %v1273 = vpop.f32.mrb[0].mxu0
        %v1274 = vadd.f32 0.0, %v1273
        %v1275 = vpop.f32.mrb[0].mxu0
        %v1276 = vadd.f32 0.0, %v1275
        %1277 = vmatprep.mubr.f32.mxu0 %v176
        %1278 = vmatmul.mubr.f32.gmra.mrb[0].mxu0 %v175
        %v1279 = vpop.f32.mrb[0].mxu0
        %v1280 = vadd.f32 0.0, %v1279
        %v1281 = vpop.f32.mrb[0].mxu0
        %v1282 = vadd.f32 0.0, %v1281
        %1283 = vdwg.mxu0
        %1284 = vmatprep.subr.mxu0 %v440
        %1285 = vmatpush1.msra.mxu0 %v439
        %1286 = vmatprep.subr.mxu0 %v448
        %1287 = vmatpush1.msra.mxu0 %v447
        %1288 = vmatprep.subr.mxu0 %v456
        %1289 = vmatpush1.msra.mxu0 %v455
        %1290 = vmatprep.subr.mxu0 %v464
        %1291 = vmatpush1.msra.mxu0 %v463
        %1292 = vmatprep.subr.mxu0 %v472
        %1293 = vmatpush1.msra.mxu0 %v471
        %1294 = vmatprep.subr.mxu0 %v480
        %1295 = vmatpush1.msra.mxu0 %v479
        %1296 = vmatprep.subr.mxu0 %v488
        %1297 = vmatpush1.msra.mxu0 %v487
        %1298 = vmatprep.subr.mxu0 %v496
        %1299 = vmatpush1.msra.mxu0 %v495
        %1300 = vmatprep.subr.mxu0 %v504
        %1301 = vmatpush1.msra.mxu0 %v503
        %1302 = vmatprep.subr.mxu0 %v512
        %1303 = vmatpush1.msra.mxu0 %v511
        %1304 = vmatprep.subr.mxu0 %v520
        %1305 = vmatpush1.msra.mxu0 %v519
        %1306 = vmatprep.subr.mxu0 %v528
        %1307 = vmatpush1.msra.mxu0 %v527
        %1308 = vmatprep.subr.mxu0 %v536
        %1309 = vmatpush1.msra.mxu0 %v535
        %1310 = vmatprep.subr.mxu0 %v544
        %1311 = vmatpush1.msra.mxu0 %v543
        %1312 = vmatprep.subr.mxu0 %v552
        %1313 = vmatpush1.msra.mxu0 %v551
        %1314 = vmatprep.subr.mxu0 %v560
        %1315 = vmatpush1.msra.mxu0 %v559
        %1316 = vmatprep.subr.mxu0 %v568
        %1317 = vmatpush1.msra.mxu0 %v567
        %1318 = vmatprep.subr.mxu0 %v576
        %1319 = vmatpush1.msra.mxu0 %v575
        %1320 = vmatprep.subr.mxu0 %v584
        %1321 = vmatpush1.msra.mxu0 %v583
        %1322 = vmatprep.subr.mxu0 %v592
        %1323 = vmatpush1.msra.mxu0 %v591
        %1324 = vmatprep.subr.mxu0 %v600
        %1325 = vmatpush1.msra.mxu0 %v599
        %1326 = vmatprep.subr.mxu0 %v608
        %1327 = vmatpush1.msra.mxu0 %v607
        %1328 = vmatprep.subr.mxu0 %v616
        %1329 = vmatpush1.msra.mxu0 %v615
        %1330 = vmatprep.subr.mxu0 %v624
        %1331 = vmatpush1.msra.mxu0 %v623
        %1332 = vmatprep.subr.mxu0 %v632
        %1333 = vmatpush1.msra.mxu0 %v631
        %1334 = vmatprep.subr.mxu0 %v640
        %1335 = vmatpush1.msra.mxu0 %v639
        %1336 = vmatprep.subr.mxu0 %v648
        %1337 = vmatpush1.msra.mxu0 %v647
        %1338 = vmatprep.subr.mxu0 %v656
        %1339 = vmatpush1.msra.mxu0 %v655
        %1340 = vmatprep.subr.mxu0 %v664
        %1341 = vmatpush1.msra.mxu0 %v663
        %1342 = vmatprep.subr.mxu0 %v672
        %1343 = vmatpush1.msra.mxu0 %v671
        %1344 = vmatprep.subr.mxu0 %v680
        %1345 = vmatpush1.msra.mxu0 %v679
        %1346 = vmatprep.subr.mxu0 %v688
        %1347 = vmatpush1.msra.mxu0 %v687
        %1348 = vmatprep.mubr.f32.mxu0 %v170
        %1349 = vmatmul.mubr.f32.gmra.mrb[0].mxu0 %v169
        %v1350 = vpop.f32.mrb[0].mxu0
        %v1351 = vadd.f32 %v1274, %v1350
        %v1352 = vpop.f32.mrb[0].mxu0
        %v1353 = vadd.f32 %v1276, %v1352
        %1354 = vmatprep.mubr.f32.mxu0 %v178
        %1355 = vmatmul.mubr.f32.gmra.mrb[0].mxu0 %v177
        %v1356 = vpop.f32.mrb[0].mxu0
        %v1357 = vadd.f32 %v1280, %v1356
        %v1358 = vpop.f32.mrb[0].mxu0
        %v1359 = vadd.f32 %v1282, %v1358
        %1360 = vdwg.mxu0
        %1361 = vmatprep.subr.mxu0 %v696
        %1362 = vmatpush1.msra.mxu0 %v695
        %1363 = vmatprep.subr.mxu0 %v704
        %1364 = vmatpush1.msra.mxu0 %v703
        %1365 = vmatprep.subr.mxu0 %v712
        %1366 = vmatpush1.msra.mxu0 %v711
        %1367 = vmatprep.subr.mxu0 %v720
        %1368 = vmatpush1.msra.mxu0 %v719
        %1369 = vmatprep.subr.mxu0 %v728
        %1370 = vmatpush1.msra.mxu0 %v727
        %1371 = vmatprep.subr.mxu0 %v736
        %1372 = vmatpush1.msra.mxu0 %v735
        %1373 = vmatprep.subr.mxu0 %v744
        %1374 = vmatpush1.msra.mxu0 %v743
        %1375 = vmatprep.subr.mxu0 %v752
        %1376 = vmatpush1.msra.mxu0 %v751
        %1377 = vmatprep.subr.mxu0 %v760
        %1378 = vmatpush1.msra.mxu0 %v759
        %1379 = vmatprep.subr.mxu0 %v768
        %1380 = vmatpush1.msra.mxu0 %v767
        %1381 = vmatprep.subr.mxu0 %v776
        %1382 = vmatpush1.msra.mxu0 %v775
        %1383 = vmatprep.subr.mxu0 %v784
        %1384 = vmatpush1.msra.mxu0 %v783
        %1385 = vmatprep.subr.mxu0 %v792
        %1386 = vmatpush1.msra.mxu0 %v791
        %1387 = vmatprep.subr.mxu0 %v800
        %1388 = vmatpush1.msra.mxu0 %v799
        %1389 = vmatprep.subr.mxu0 %v808
        %1390 = vmatpush1.msra.mxu0 %v807
        %1391 = vmatprep.subr.mxu0 %v816
        %1392 = vmatpush1.msra.mxu0 %v815
        %1393 = vmatprep.subr.mxu0 %v824
        %1394 = vmatpush1.msra.mxu0 %v823
        %1395 = vmatprep.subr.mxu0 %v832
        %1396 = vmatpush1.msra.mxu0 %v831
        %1397 = vmatprep.subr.mxu0 %v840
        %1398 = vmatpush1.msra.mxu0 %v839
        %1399 = vmatprep.subr.mxu0 %v848
        %1400 = vmatpush1.msra.mxu0 %v847
        %1401 = vmatprep.subr.mxu0 %v856
        %1402 = vmatpush1.msra.mxu0 %v855
        %1403 = vmatprep.subr.mxu0 %v864
        %1404 = vmatpush1.msra.mxu0 %v863
        %1405 = vmatprep.subr.mxu0 %v872
        %1406 = vmatpush1.msra.mxu0 %v871
        %1407 = vmatprep.subr.mxu0 %v880
        %1408 = vmatpush1.msra.mxu0 %v879
        %1409 = vmatprep.subr.mxu0 %v888
        %1410 = vmatpush1.msra.mxu0 %v887
        %1411 = vmatprep.subr.mxu0 %v896
        %1412 = vmatpush1.msra.mxu0 %v895
        %1413 = vmatprep.subr.mxu0 %v904
        %1414 = vmatpush1.msra.mxu0 %v903
        %1415 = vmatprep.subr.mxu0 %v912
        %1416 = vmatpush1.msra.mxu0 %v911
        %1417 = vmatprep.subr.mxu0 %v920
        %1418 = vmatpush1.msra.mxu0 %v919
        %1419 = vmatprep.subr.mxu0 %v928
        %1420 = vmatpush1.msra.mxu0 %v927
        %1421 = vmatprep.subr.mxu0 %v936
        %1422 = vmatpush1.msra.mxu0 %v935
        %1423 = vmatprep.subr.mxu0 %v944
        %1424 = vmatpush1.msra.mxu0 %v943
        %1425 = vmatprep.mubr.f32.mxu0 %v172
        %1426 = vmatmul.mubr.f32.gmra.mrb[0].mxu0 %v171
        %v1427 = vpop.f32.mrb[0].mxu0
        %v1428 = vadd.f32 %v1351, %v1427
        %v1429 = vpop.f32.mrb[0].mxu0
        %v1430 = vadd.f32 %v1353, %v1429
        %1431 = vmatprep.mubr.f32.mxu0 %v180
        %1432 = vmatmul.mubr.f32.gmra.mrb[0].mxu0 %v179
        %v1433 = vpop.f32.mrb[0].mxu0
        %v1434 = vadd.f32 %v1357, %v1433
        %v1435 = vpop.f32.mrb[0].mxu0
        %v1436 = vadd.f32 %v1359, %v1435
        %1437 = vdwg.mxu0
        %1438 = vmatprep.subr.mxu0 %v952
        %1439 = vmatpush1.msra.mxu0 %v951
        %1440 = vmatprep.subr.mxu0 %v960
        %1441 = vmatpush1.msra.mxu0 %v959
        %1442 = vmatprep.subr.mxu0 %v968
        %1443 = vmatpush1.msra.mxu0 %v967
        %1444 = vmatprep.subr.mxu0 %v976
        %1445 = vmatpush1.msra.mxu0 %v975
        %1446 = vmatprep.subr.mxu0 %v984
        %1447 = vmatpush1.msra.mxu0 %v983
        %1448 = vmatprep.subr.mxu0 %v992
        %1449 = vmatpush1.msra.mxu0 %v991
        %1450 = vmatprep.subr.mxu0 %v1000
        %1451 = vmatpush1.msra.mxu0 %v999
        %1452 = vmatprep.subr.mxu0 %v1008
        %1453 = vmatpush1.msra.mxu0 %v1007
        %1454 = vmatprep.subr.mxu0 %v1016
        %1455 = vmatpush1.msra.mxu0 %v1015
        %1456 = vmatprep.subr.mxu0 %v1024
        %1457 = vmatpush1.msra.mxu0 %v1023
        %1458 = vmatprep.subr.mxu0 %v1032
        %1459 = vmatpush1.msra.mxu0 %v1031
        %1460 = vmatprep.subr.mxu0 %v1040
        %1461 = vmatpush1.msra.mxu0 %v1039
        %1462 = vmatprep.subr.mxu0 %v1048
        %1463 = vmatpush1.msra.mxu0 %v1047
        %1464 = vmatprep.subr.mxu0 %v1056
        %1465 = vmatpush1.msra.mxu0 %v1055
        %1466 = vmatprep.subr.mxu0 %v1064
        %1467 = vmatpush1.msra.mxu0 %v1063
        %1468 = vmatprep.subr.mxu0 %v1072
        %1469 = vmatpush1.msra.mxu0 %v1071
        %1470 = vmatprep.subr.mxu0 %v1080
        %1471 = vmatpush1.msra.mxu0 %v1079
        %1472 = vmatprep.subr.mxu0 %v1088
        %1473 = vmatpush1.msra.mxu0 %v1087
        %1474 = vmatprep.subr.mxu0 %v1096
        %1475 = vmatpush1.msra.mxu0 %v1095
        %1476 = vmatprep.subr.mxu0 %v1104
        %1477 = vmatpush1.msra.mxu0 %v1103
        %1478 = vmatprep.subr.mxu0 %v1112
        %1479 = vmatpush1.msra.mxu0 %v1111
        %1480 = vmatprep.subr.mxu0 %v1120
        %1481 = vmatpush1.msra.mxu0 %v1119
        %1482 = vmatprep.subr.mxu0 %v1128
        %1483 = vmatpush1.msra.mxu0 %v1127
        %1484 = vmatprep.subr.mxu0 %v1136
        %1485 = vmatpush1.msra.mxu0 %v1135
        %1486 = vmatprep.subr.mxu0 %v1144
        %1487 = vmatpush1.msra.mxu0 %v1143
        %1488 = vmatprep.subr.mxu0 %v1152
        %1489 = vmatpush1.msra.mxu0 %v1151
        %1490 = vmatprep.subr.mxu0 %v1160
        %1491 = vmatpush1.msra.mxu0 %v1159
        %1492 = vmatprep.subr.mxu0 %v1168
        %1493 = vmatpush1.msra.mxu0 %v1167
        %1494 = vmatprep.subr.mxu0 %v1176
        %1495 = vmatpush1.msra.mxu0 %v1175
        %1496 = vmatprep.subr.mxu0 %v1184
        %1497 = vmatpush1.msra.mxu0 %v1183
        %1498 = vmatprep.subr.mxu0 %v1192
        %1499 = vmatpush1.msra.mxu0 %v1191
        %1500 = vmatprep.subr.mxu0 %v1200
        %1501 = vmatpush1.msra.mxu0 %v1199
        %1502 = vmatprep.mubr.f32.mxu0 %v174
        %1503 = vmatmul.mubr.f32.gmra.mrb[0].mxu0 %v173
        %v1504 = vpop.f32.mrb[0].mxu0
        %v1505 = vadd.f32 %v1428, %v1504
        %v1506 = vpop.f32.mrb[0].mxu0
        %v1507 = vadd.f32 %v1430, %v1506
        %1508 = vmatprep.mubr.f32.mxu0 %v182
        %1509 = vmatmul.mubr.f32.gmra.mrb[0].mxu0 %v181
        %v1510 = vpop.f32.mrb[0].mxu0
        %v1511 = vadd.f32 %v1434, %v1510
        %v1512 = vpop.f32.mrb[0].mxu0
        %v1513 = vadd.f32 %v1436, %v1512
        %1514 = vdwg.mxu0
        %1515 = vmatprep.subr.mxu0 %v186
        %1516 = vmatpush1.msra.mxu0 %v185
        %1517 = vmatprep.subr.mxu0 %v194
        %1518 = vmatpush1.msra.mxu0 %v193
        %1519 = vmatprep.subr.mxu0 %v202
        %1520 = vmatpush1.msra.mxu0 %v201
        %1521 = vmatprep.subr.mxu0 %v210
        %1522 = vmatpush1.msra.mxu0 %v209
        %1523 = vmatprep.subr.mxu0 %v218
        %1524 = vmatpush1.msra.mxu0 %v217
        %1525 = vmatprep.subr.mxu0 %v226
        %1526 = vmatpush1.msra.mxu0 %v225
        %1527 = vmatprep.subr.mxu0 %v234
        %1528 = vmatpush1.msra.mxu0 %v233
        %1529 = vmatprep.subr.mxu0 %v242
        %1530 = vmatpush1.msra.mxu0 %v241
        %1531 = vmatprep.subr.mxu0 %v250
        %1532 = vmatpush1.msra.mxu0 %v249
        %1533 = vmatprep.subr.mxu0 %v258
        %1534 = vmatpush1.msra.mxu0 %v257
        %1535 = vmatprep.subr.mxu0 %v266
        %1536 = vmatpush1.msra.mxu0 %v265
        %1537 = vmatprep.subr.mxu0 %v274
        %1538 = vmatpush1.msra.mxu0 %v273
        %1539 = vmatprep.subr.mxu0 %v282
        %1540 = vmatpush1.msra.mxu0 %v281
        %1541 = vmatprep.subr.mxu0 %v290
        %1542 = vmatpush1.msra.mxu0 %v289
        %1543 = vmatprep.subr.mxu0 %v298
        %1544 = vmatpush1.msra.mxu0 %v297
        %1545 = vmatprep.subr.mxu0 %v306
        %1546 = vmatpush1.msra.mxu0 %v305
        %1547 = vmatprep.subr.mxu0 %v314
        %1548 = vmatpush1.msra.mxu0 %v313
        %1549 = vmatprep.subr.mxu0 %v322
        %1550 = vmatpush1.msra.mxu0 %v321
        %1551 = vmatprep.subr.mxu0 %v330
        %1552 = vmatpush1.msra.mxu0 %v329
        %1553 = vmatprep.subr.mxu0 %v338
        %1554 = vmatpush1.msra.mxu0 %v337
        %1555 = vmatprep.subr.mxu0 %v346
        %1556 = vmatpush1.msra.mxu0 %v345
        %1557 = vmatprep.subr.mxu0 %v354
        %1558 = vmatpush1.msra.mxu0 %v353
        %1559 = vmatprep.subr.mxu0 %v362
        %1560 = vmatpush1.msra.mxu0 %v361
        %1561 = vmatprep.subr.mxu0 %v370
        %1562 = vmatpush1.msra.mxu0 %v369
        %1563 = vmatprep.subr.mxu0 %v378
        %1564 = vmatpush1.msra.mxu0 %v377
        %1565 = vmatprep.subr.mxu0 %v386
        %1566 = vmatpush1.msra.mxu0 %v385
        %1567 = vmatprep.subr.mxu0 %v394
        %1568 = vmatpush1.msra.mxu0 %v393
        %1569 = vmatprep.subr.mxu0 %v402
        %1570 = vmatpush1.msra.mxu0 %v401
        %1571 = vmatprep.subr.mxu0 %v410
        %1572 = vmatpush1.msra.mxu0 %v409
        %1573 = vmatprep.subr.mxu0 %v418
        %1574 = vmatpush1.msra.mxu0 %v417
        %1575 = vmatprep.subr.mxu0 %v426
        %1576 = vmatpush1.msra.mxu0 %v425
        %1577 = vmatprep.subr.mxu0 %v434
        %1578 = vmatpush1.msra.mxu0 %v433
        %1579 = vmatprep.mubr.f32.mxu0 %v168
        %1580 = vmatmul.mubr.f32.gmra.mrb[0].mxu0 %v167
        %v1581 = vpop.f32.mrb[0].mxu0
        %v1582 = vadd.f32 0.0, %v1581
        %v1583 = vpop.f32.mrb[0].mxu0
        %v1584 = vadd.f32 0.0, %v1583
        %1585 = vmatprep.mubr.f32.mxu0 %v176
        %1586 = vmatmul.mubr.f32.gmra.mrb[0].mxu0 %v175
        %v1587 = vpop.f32.mrb[0].mxu0
        %v1588 = vadd.f32 0.0, %v1587
        %v1589 = vpop.f32.mrb[0].mxu0
        %v1590 = vadd.f32 0.0, %v1589
        %1591 = vdwg.mxu0
        %1592 = vmatprep.subr.mxu0 %v442
        %1593 = vmatpush1.msra.mxu0 %v441
        %1594 = vmatprep.subr.mxu0 %v450
        %1595 = vmatpush1.msra.mxu0 %v449
        %1596 = vmatprep.subr.mxu0 %v458
        %1597 = vmatpush1.msra.mxu0 %v457
        %1598 = vmatprep.subr.mxu0 %v466
        %1599 = vmatpush1.msra.mxu0 %v465
        %1600 = vmatprep.subr.mxu0 %v474
        %1601 = vmatpush1.msra.mxu0 %v473
        %1602 = vmatprep.subr.mxu0 %v482
        %1603 = vmatpush1.msra.mxu0 %v481
        %1604 = vmatprep.subr.mxu0 %v490
        %1605 = vmatpush1.msra.mxu0 %v489
        %1606 = vmatprep.subr.mxu0 %v498
        %1607 = vmatpush1.msra.mxu0 %v497
        %1608 = vmatprep.subr.mxu0 %v506
        %1609 = vmatpush1.msra.mxu0 %v505
        %1610 = vmatprep.subr.mxu0 %v514
        %1611 = vmatpush1.msra.mxu0 %v513
        %1612 = vmatprep.subr.mxu0 %v522
        %1613 = vmatpush1.msra.mxu0 %v521
        %1614 = vmatprep.subr.mxu0 %v530
        %1615 = vmatpush1.msra.mxu0 %v529
        %1616 = vmatprep.subr.mxu0 %v538
        %1617 = vmatpush1.msra.mxu0 %v537
        %1618 = vmatprep.subr.mxu0 %v546
        %1619 = vmatpush1.msra.mxu0 %v545
        %1620 = vmatprep.subr.mxu0 %v554
        %1621 = vmatpush1.msra.mxu0 %v553
        %1622 = vmatprep.subr.mxu0 %v562
        %1623 = vmatpush1.msra.mxu0 %v561
        %1624 = vmatprep.subr.mxu0 %v570
        %1625 = vmatpush1.msra.mxu0 %v569
        %1626 = vmatprep.subr.mxu0 %v578
        %1627 = vmatpush1.msra.mxu0 %v577
        %1628 = vmatprep.subr.mxu0 %v586
        %1629 = vmatpush1.msra.mxu0 %v585
        %1630 = vmatprep.subr.mxu0 %v594
        %1631 = vmatpush1.msra.mxu0 %v593
        %1632 = vmatprep.subr.mxu0 %v602
        %1633 = vmatpush1.msra.mxu0 %v601
        %1634 = vmatprep.subr.mxu0 %v610
        %1635 = vmatpush1.msra.mxu0 %v609
        %1636 = vmatprep.subr.mxu0 %v618
        %1637 = vmatpush1.msra.mxu0 %v617
        %1638 = vmatprep.subr.mxu0 %v626
        %1639 = vmatpush1.msra.mxu0 %v625
        %1640 = vmatprep.subr.mxu0 %v634
        %1641 = vmatpush1.msra.mxu0 %v633
        %1642 = vmatprep.subr.mxu0 %v642
        %1643 = vmatpush1.msra.mxu0 %v641
        %1644 = vmatprep.subr.mxu0 %v650
        %1645 = vmatpush1.msra.mxu0 %v649
        %1646 = vmatprep.subr.mxu0 %v658
        %1647 = vmatpush1.msra.mxu0 %v657
        %1648 = vmatprep.subr.mxu0 %v666
        %1649 = vmatpush1.msra.mxu0 %v665
        %1650 = vmatprep.subr.mxu0 %v674
        %1651 = vmatpush1.msra.mxu0 %v673
        %1652 = vmatprep.subr.mxu0 %v682
        %1653 = vmatpush1.msra.mxu0 %v681
        %1654 = vmatprep.subr.mxu0 %v690
        %1655 = vmatpush1.msra.mxu0 %v689
        %1656 = vmatprep.mubr.f32.mxu0 %v170
        %1657 = vmatmul.mubr.f32.gmra.mrb[0].mxu0 %v169
        %v1658 = vpop.f32.mrb[0].mxu0
        %v1659 = vadd.f32 %v1582, %v1658
        %v1660 = vpop.f32.mrb[0].mxu0
        %v1661 = vadd.f32 %v1584, %v1660
        %1662 = vmatprep.mubr.f32.mxu0 %v178
        %1663 = vmatmul.mubr.f32.gmra.mrb[0].mxu0 %v177
        %v1664 = vpop.f32.mrb[0].mxu0
        %v1665 = vadd.f32 %v1588, %v1664
        %v1666 = vpop.f32.mrb[0].mxu0
        %v1667 = vadd.f32 %v1590, %v1666
        %1668 = vdwg.mxu0
        %1669 = vmatprep.subr.mxu0 %v698
        %1670 = vmatpush1.msra.mxu0 %v697
        %1671 = vmatprep.subr.mxu0 %v706
        %1672 = vmatpush1.msra.mxu0 %v705
        %1673 = vmatprep.subr.mxu0 %v714
        %1674 = vmatpush1.msra.mxu0 %v713
        %1675 = vmatprep.subr.mxu0 %v722
        %1676 = vmatpush1.msra.mxu0 %v721
        %1677 = vmatprep.subr.mxu0 %v730
        %1678 = vmatpush1.msra.mxu0 %v729
        %1679 = vmatprep.subr.mxu0 %v738
        %1680 = vmatpush1.msra.mxu0 %v737
        %1681 = vmatprep.subr.mxu0 %v746
        %1682 = vmatpush1.msra.mxu0 %v745
        %1683 = vmatprep.subr.mxu0 %v754
        %1684 = vmatpush1.msra.mxu0 %v753
        %1685 = vmatprep.subr.mxu0 %v762
        %1686 = vmatpush1.msra.mxu0 %v761
        %1687 = vmatprep.subr.mxu0 %v770
        %1688 = vmatpush1.msra.mxu0 %v769
        %1689 = vmatprep.subr.mxu0 %v778
        %1690 = vmatpush1.msra.mxu0 %v777
        %1691 = vmatprep.subr.mxu0 %v786
        %1692 = vmatpush1.msra.mxu0 %v785
        %1693 = vmatprep.subr.mxu0 %v794
        %1694 = vmatpush1.msra.mxu0 %v793
        %1695 = vmatprep.subr.mxu0 %v802
        %1696 = vmatpush1.msra.mxu0 %v801
        %1697 = vmatprep.subr.mxu0 %v810
        %1698 = vmatpush1.msra.mxu0 %v809
        %1699 = vmatprep.subr.mxu0 %v818
        %1700 = vmatpush1.msra.mxu0 %v817
        %1701 = vmatprep.subr.mxu0 %v826
        %1702 = vmatpush1.msra.mxu0 %v825
        %1703 = vmatprep.subr.mxu0 %v834
        %1704 = vmatpush1.msra.mxu0 %v833
        %1705 = vmatprep.subr.mxu0 %v842
        %1706 = vmatpush1.msra.mxu0 %v841
        %1707 = vmatprep.subr.mxu0 %v850
        %1708 = vmatpush1.msra.mxu0 %v849
        %1709 = vmatprep.subr.mxu0 %v858
        %1710 = vmatpush1.msra.mxu0 %v857
        %1711 = vmatprep.subr.mxu0 %v866
        %1712 = vmatpush1.msra.mxu0 %v865
        %1713 = vmatprep.subr.mxu0 %v874
        %1714 = vmatpush1.msra.mxu0 %v873
        %1715 = vmatprep.subr.mxu0 %v882
        %1716 = vmatpush1.msra.mxu0 %v881
        %1717 = vmatprep.subr.mxu0 %v890
        %1718 = vmatpush1.msra.mxu0 %v889
        %1719 = vmatprep.subr.mxu0 %v898
        %1720 = vmatpush1.msra.mxu0 %v897
        %1721 = vmatprep.subr.mxu0 %v906
        %1722 = vmatpush1.msra.mxu0 %v905
        %1723 = vmatprep.subr.mxu0 %v914
        %1724 = vmatpush1.msra.mxu0 %v913
        %1725 = vmatprep.subr.mxu0 %v922
        %1726 = vmatpush1.msra.mxu0 %v921
        %1727 = vmatprep.subr.mxu0 %v930
        %1728 = vmatpush1.msra.mxu0 %v929
        %1729 = vmatprep.subr.mxu0 %v938
        %1730 = vmatpush1.msra.mxu0 %v937
        %1731 = vmatprep.subr.mxu0 %v946
        %1732 = vmatpush1.msra.mxu0 %v945
        %1733 = vmatprep.mubr.f32.mxu0 %v172
        %1734 = vmatmul.mubr.f32.gmra.mrb[0].mxu0 %v171
        %v1735 = vpop.f32.mrb[0].mxu0
        %v1736 = vadd.f32 %v1659, %v1735
        %v1737 = vpop.f32.mrb[0].mxu0
        %v1738 = vadd.f32 %v1661, %v1737
        %1739 = vmatprep.mubr.f32.mxu0 %v180
        %1740 = vmatmul.mubr.f32.gmra.mrb[0].mxu0 %v179
        %v1741 = vpop.f32.mrb[0].mxu0
        %v1742 = vadd.f32 %v1665, %v1741
        %v1743 = vpop.f32.mrb[0].mxu0
        %v1744 = vadd.f32 %v1667, %v1743
        %1745 = vdwg.mxu0
        %1746 = vmatprep.subr.mxu0 %v954
        %1747 = vmatpush1.msra.mxu0 %v953
        %1748 = vmatprep.subr.mxu0 %v962
        %1749 = vmatpush1.msra.mxu0 %v961
        %1750 = vmatprep.subr.mxu0 %v970
        %1751 = vmatpush1.msra.mxu0 %v969
        %1752 = vmatprep.subr.mxu0 %v978
        %1753 = vmatpush1.msra.mxu0 %v977
        %1754 = vmatprep.subr.mxu0 %v986
        %1755 = vmatpush1.msra.mxu0 %v985
        %1756 = vmatprep.subr.mxu0 %v994
        %1757 = vmatpush1.msra.mxu0 %v993
        %1758 = vmatprep.subr.mxu0 %v1002
        %1759 = vmatpush1.msra.mxu0 %v1001
        %1760 = vmatprep.subr.mxu0 %v1010
        %1761 = vmatpush1.msra.mxu0 %v1009
        %1762 = vmatprep.subr.mxu0 %v1018
        %1763 = vmatpush1.msra.mxu0 %v1017
        %1764 = vmatprep.subr.mxu0 %v1026
        %1765 = vmatpush1.msra.mxu0 %v1025
        %1766 = vmatprep.subr.mxu0 %v1034
        %1767 = vmatpush1.msra.mxu0 %v1033
        %1768 = vmatprep.subr.mxu0 %v1042
        %1769 = vmatpush1.msra.mxu0 %v1041
        %1770 = vmatprep.subr.mxu0 %v1050
        %1771 = vmatpush1.msra.mxu0 %v1049
        %1772 = vmatprep.subr.mxu0 %v1058
        %1773 = vmatpush1.msra.mxu0 %v1057
        %1774 = vmatprep.subr.mxu0 %v1066
        %1775 = vmatpush1.msra.mxu0 %v1065
        %1776 = vmatprep.subr.mxu0 %v1074
        %1777 = vmatpush1.msra.mxu0 %v1073
        %1778 = vmatprep.subr.mxu0 %v1082
        %1779 = vmatpush1.msra.mxu0 %v1081
        %1780 = vmatprep.subr.mxu0 %v1090
        %1781 = vmatpush1.msra.mxu0 %v1089
        %1782 = vmatprep.subr.mxu0 %v1098
        %1783 = vmatpush1.msra.mxu0 %v1097
        %1784 = vmatprep.subr.mxu0 %v1106
        %1785 = vmatpush1.msra.mxu0 %v1105
        %1786 = vmatprep.subr.mxu0 %v1114
        %1787 = vmatpush1.msra.mxu0 %v1113
        %1788 = vmatprep.subr.mxu0 %v1122
        %1789 = vmatpush1.msra.mxu0 %v1121
        %1790 = vmatprep.subr.mxu0 %v1130
        %1791 = vmatpush1.msra.mxu0 %v1129
        %1792 = vmatprep.subr.mxu0 %v1138
        %1793 = vmatpush1.msra.mxu0 %v1137
        %1794 = vmatprep.subr.mxu0 %v1146
        %1795 = vmatpush1.msra.mxu0 %v1145
        %1796 = vmatprep.subr.mxu0 %v1154
        %1797 = vmatpush1.msra.mxu0 %v1153
        %1798 = vmatprep.subr.mxu0 %v1162
        %1799 = vmatpush1.msra.mxu0 %v1161
        %1800 = vmatprep.subr.mxu0 %v1170
        %1801 = vmatpush1.msra.mxu0 %v1169
        %1802 = vmatprep.subr.mxu0 %v1178
        %1803 = vmatpush1.msra.mxu0 %v1177
        %1804 = vmatprep.subr.mxu0 %v1186
        %1805 = vmatpush1.msra.mxu0 %v1185
        %1806 = vmatprep.subr.mxu0 %v1194
        %1807 = vmatpush1.msra.mxu0 %v1193
        %1808 = vmatprep.subr.mxu0 %v1202
        %1809 = vmatpush1.msra.mxu0 %v1201
        %1810 = vmatprep.mubr.f32.mxu0 %v174
        %1811 = vmatmul.mubr.f32.gmra.mrb[0].mxu0 %v173
        %v1812 = vpop.f32.mrb[0].mxu0
        %v1813 = vadd.f32 %v1736, %v1812
        %v1814 = vpop.f32.mrb[0].mxu0
        %v1815 = vadd.f32 %v1738, %v1814
        %1816 = vmatprep.mubr.f32.mxu0 %v182
        %1817 = vmatmul.mubr.f32.gmra.mrb[0].mxu0 %v181
        %v1818 = vpop.f32.mrb[0].mxu0
        %v1819 = vadd.f32 %v1742, %v1818
        %v1820 = vpop.f32.mrb[0].mxu0
        %v1821 = vadd.f32 %v1744, %v1820
        %1822 = vdwg.mxu0
        %1823 = vmatprep.subr.mxu0 %v188
        %1824 = vmatpush1.msra.mxu0 %v187
        %1825 = vmatprep.subr.mxu0 %v196
        %1826 = vmatpush1.msra.mxu0 %v195
        %1827 = vmatprep.subr.mxu0 %v204
        %1828 = vmatpush1.msra.mxu0 %v203
        %1829 = vmatprep.subr.mxu0 %v212
        %1830 = vmatpush1.msra.mxu0 %v211
        %1831 = vmatprep.subr.mxu0 %v220
        %1832 = vmatpush1.msra.mxu0 %v219
        %1833 = vmatprep.subr.mxu0 %v228
        %1834 = vmatpush1.msra.mxu0 %v227
        %1835 = vmatprep.subr.mxu0 %v236
        %1836 = vmatpush1.msra.mxu0 %v235
        %1837 = vmatprep.subr.mxu0 %v244
        %1838 = vmatpush1.msra.mxu0 %v243
        %1839 = vmatprep.subr.mxu0 %v252
        %1840 = vmatpush1.msra.mxu0 %v251
        %1841 = vmatprep.subr.mxu0 %v260
        %1842 = vmatpush1.msra.mxu0 %v259
        %1843 = vmatprep.subr.mxu0 %v268
        %1844 = vmatpush1.msra.mxu0 %v267
        %1845 = vmatprep.subr.mxu0 %v276
        %1846 = vmatpush1.msra.mxu0 %v275
        %1847 = vmatprep.subr.mxu0 %v284
        %1848 = vmatpush1.msra.mxu0 %v283
        %1849 = vmatprep.subr.mxu0 %v292
        %1850 = vmatpush1.msra.mxu0 %v291
        %1851 = vmatprep.subr.mxu0 %v300
        %1852 = vmatpush1.msra.mxu0 %v299
        %1853 = vmatprep.subr.mxu0 %v308
        %1854 = vmatpush1.msra.mxu0 %v307
        %1855 = vmatprep.subr.mxu0 %v316
        %1856 = vmatpush1.msra.mxu0 %v315
        %1857 = vmatprep.subr.mxu0 %v324
        %1858 = vmatpush1.msra.mxu0 %v323
        %1859 = vmatprep.subr.mxu0 %v332
        %1860 = vmatpush1.msra.mxu0 %v331
        %1861 = vmatprep.subr.mxu0 %v340
        %1862 = vmatpush1.msra.mxu0 %v339
        %1863 = vmatprep.subr.mxu0 %v348
        %1864 = vmatpush1.msra.mxu0 %v347
        %1865 = vmatprep.subr.mxu0 %v356
        %1866 = vmatpush1.msra.mxu0 %v355
        %1867 = vmatprep.subr.mxu0 %v364
        %1868 = vmatpush1.msra.mxu0 %v363
        %1869 = vmatprep.subr.mxu0 %v372
        %1870 = vmatpush1.msra.mxu0 %v371
        %1871 = vmatprep.subr.mxu0 %v380
        %1872 = vmatpush1.msra.mxu0 %v379
        %1873 = vmatprep.subr.mxu0 %v388
        %1874 = vmatpush1.msra.mxu0 %v387
        %1875 = vmatprep.subr.mxu0 %v396
        %1876 = vmatpush1.msra.mxu0 %v395
        %1877 = vmatprep.subr.mxu0 %v404
        %1878 = vmatpush1.msra.mxu0 %v403
        %1879 = vmatprep.subr.mxu0 %v412
        %1880 = vmatpush1.msra.mxu0 %v411
        %1881 = vmatprep.subr.mxu0 %v420
        %1882 = vmatpush1.msra.mxu0 %v419
        %1883 = vmatprep.subr.mxu0 %v428
        %1884 = vmatpush1.msra.mxu0 %v427
        %1885 = vmatprep.subr.mxu0 %v436
        %1886 = vmatpush1.msra.mxu0 %v435
        %1887 = vmatprep.mubr.f32.mxu0 %v168
        %1888 = vmatmul.mubr.f32.gmra.mrb[0].mxu0 %v167
        %v1889 = vpop.f32.mrb[0].mxu0
        %v1890 = vadd.f32 0.0, %v1889
        %v1891 = vpop.f32.mrb[0].mxu0
        %v1892 = vadd.f32 0.0, %v1891
        %1893 = vmatprep.mubr.f32.mxu0 %v176
        %1894 = vmatmul.mubr.f32.gmra.mrb[0].mxu0 %v175
        %v1895 = vpop.f32.mrb[0].mxu0
        %v1896 = vadd.f32 0.0, %v1895
        %v1897 = vpop.f32.mrb[0].mxu0
        %v1898 = vadd.f32 0.0, %v1897
        %1899 = vdwg.mxu0
        %1900 = vmatprep.subr.mxu0 %v444
        %1901 = vmatpush1.msra.mxu0 %v443
        %1902 = vmatprep.subr.mxu0 %v452
        %1903 = vmatpush1.msra.mxu0 %v451
        %1904 = vmatprep.subr.mxu0 %v460
        %1905 = vmatpush1.msra.mxu0 %v459
        %1906 = vmatprep.subr.mxu0 %v468
        %1907 = vmatpush1.msra.mxu0 %v467
        %1908 = vmatprep.subr.mxu0 %v476
        %1909 = vmatpush1.msra.mxu0 %v475
        %1910 = vmatprep.subr.mxu0 %v484
        %1911 = vmatpush1.msra.mxu0 %v483
        %1912 = vmatprep.subr.mxu0 %v492
        %1913 = vmatpush1.msra.mxu0 %v491
        %1914 = vmatprep.subr.mxu0 %v500
        %1915 = vmatpush1.msra.mxu0 %v499
        %1916 = vmatprep.subr.mxu0 %v508
        %1917 = vmatpush1.msra.mxu0 %v507
        %1918 = vmatprep.subr.mxu0 %v516
        %1919 = vmatpush1.msra.mxu0 %v515
        %1920 = vmatprep.subr.mxu0 %v524
        %1921 = vmatpush1.msra.mxu0 %v523
        %1922 = vmatprep.subr.mxu0 %v532
        %1923 = vmatpush1.msra.mxu0 %v531
        %1924 = vmatprep.subr.mxu0 %v540
        %1925 = vmatpush1.msra.mxu0 %v539
        %1926 = vmatprep.subr.mxu0 %v548
        %1927 = vmatpush1.msra.mxu0 %v547
        %1928 = vmatprep.subr.mxu0 %v556
        %1929 = vmatpush1.msra.mxu0 %v555
        %1930 = vmatprep.subr.mxu0 %v564
        %1931 = vmatpush1.msra.mxu0 %v563
        %1932 = vmatprep.subr.mxu0 %v572
        %1933 = vmatpush1.msra.mxu0 %v571
        %1934 = vmatprep.subr.mxu0 %v580
        %1935 = vmatpush1.msra.mxu0 %v579
        %1936 = vmatprep.subr.mxu0 %v588
        %1937 = vmatpush1.msra.mxu0 %v587
        %1938 = vmatprep.subr.mxu0 %v596
        %1939 = vmatpush1.msra.mxu0 %v595
        %1940 = vmatprep.subr.mxu0 %v604
        %1941 = vmatpush1.msra.mxu0 %v603
        %1942 = vmatprep.subr.mxu0 %v612
        %1943 = vmatpush1.msra.mxu0 %v611
        %1944 = vmatprep.subr.mxu0 %v620
        %1945 = vmatpush1.msra.mxu0 %v619
        %1946 = vmatprep.subr.mxu0 %v628
        %1947 = vmatpush1.msra.mxu0 %v627
        %1948 = vmatprep.subr.mxu0 %v636
        %1949 = vmatpush1.msra.mxu0 %v635
        %1950 = vmatprep.subr.mxu0 %v644
        %1951 = vmatpush1.msra.mxu0 %v643
        %1952 = vmatprep.subr.mxu0 %v652
        %1953 = vmatpush1.msra.mxu0 %v651
        %1954 = vmatprep.subr.mxu0 %v660
        %1955 = vmatpush1.msra.mxu0 %v659
        %1956 = vmatprep.subr.mxu0 %v668
        %1957 = vmatpush1.msra.mxu0 %v667
        %1958 = vmatprep.subr.mxu0 %v676
        %1959 = vmatpush1.msra.mxu0 %v675
        %1960 = vmatprep.subr.mxu0 %v684
        %1961 = vmatpush1.msra.mxu0 %v683
        %1962 = vmatprep.subr.mxu0 %v692
        %1963 = vmatpush1.msra.mxu0 %v691
        %1964 = vmatprep.mubr.f32.mxu0 %v170
        %1965 = vmatmul.mubr.f32.gmra.mrb[0].mxu0 %v169
        %v1966 = vpop.f32.mrb[0].mxu0
        %v1967 = vadd.f32 %v1890, %v1966
        %v1968 = vpop.f32.mrb[0].mxu0
        %v1969 = vadd.f32 %v1892, %v1968
        %1970 = vmatprep.mubr.f32.mxu0 %v178
        %1971 = vmatmul.mubr.f32.gmra.mrb[0].mxu0 %v177
        %v1972 = vpop.f32.mrb[0].mxu0
        %v1973 = vadd.f32 %v1896, %v1972
        %v1974 = vpop.f32.mrb[0].mxu0
        %v1975 = vadd.f32 %v1898, %v1974
        %1976 = vdwg.mxu0
        %1977 = vmatprep.subr.mxu0 %v700
        %1978 = vmatpush1.msra.mxu0 %v699
        %1979 = vmatprep.subr.mxu0 %v708
        %1980 = vmatpush1.msra.mxu0 %v707
        %1981 = vmatprep.subr.mxu0 %v716
        %1982 = vmatpush1.msra.mxu0 %v715
        %1983 = vmatprep.subr.mxu0 %v724
        %1984 = vmatpush1.msra.mxu0 %v723
        %1985 = vmatprep.subr.mxu0 %v732
        %1986 = vmatpush1.msra.mxu0 %v731
        %1987 = vmatprep.subr.mxu0 %v740
        %1988 = vmatpush1.msra.mxu0 %v739
        %1989 = vmatprep.subr.mxu0 %v748
        %1990 = vmatpush1.msra.mxu0 %v747
        %1991 = vmatprep.subr.mxu0 %v756
        %1992 = vmatpush1.msra.mxu0 %v755
        %1993 = vmatprep.subr.mxu0 %v764
        %1994 = vmatpush1.msra.mxu0 %v763
        %1995 = vmatprep.subr.mxu0 %v772
        %1996 = vmatpush1.msra.mxu0 %v771
        %1997 = vmatprep.subr.mxu0 %v780
        %1998 = vmatpush1.msra.mxu0 %v779
        %1999 = vmatprep.subr.mxu0 %v788
        %2000 = vmatpush1.msra.mxu0 %v787
        %2001 = vmatprep.subr.mxu0 %v796
        %2002 = vmatpush1.msra.mxu0 %v795
        %2003 = vmatprep.subr.mxu0 %v804
        %2004 = vmatpush1.msra.mxu0 %v803
        %2005 = vmatprep.subr.mxu0 %v812
        %2006 = vmatpush1.msra.mxu0 %v811
        %2007 = vmatprep.subr.mxu0 %v820
        %2008 = vmatpush1.msra.mxu0 %v819
        %2009 = vmatprep.subr.mxu0 %v828
        %2010 = vmatpush1.msra.mxu0 %v827
        %2011 = vmatprep.subr.mxu0 %v836
        %2012 = vmatpush1.msra.mxu0 %v835
        %2013 = vmatprep.subr.mxu0 %v844
        %2014 = vmatpush1.msra.mxu0 %v843
        %2015 = vmatprep.subr.mxu0 %v852
        %2016 = vmatpush1.msra.mxu0 %v851
        %2017 = vmatprep.subr.mxu0 %v860
        %2018 = vmatpush1.msra.mxu0 %v859
        %2019 = vmatprep.subr.mxu0 %v868
        %2020 = vmatpush1.msra.mxu0 %v867
        %2021 = vmatprep.subr.mxu0 %v876
        %2022 = vmatpush1.msra.mxu0 %v875
        %2023 = vmatprep.subr.mxu0 %v884
        %2024 = vmatpush1.msra.mxu0 %v883
        %2025 = vmatprep.subr.mxu0 %v892
        %2026 = vmatpush1.msra.mxu0 %v891
        %2027 = vmatprep.subr.mxu0 %v900
        %2028 = vmatpush1.msra.mxu0 %v899
        %2029 = vmatprep.subr.mxu0 %v908
        %2030 = vmatpush1.msra.mxu0 %v907
        %2031 = vmatprep.subr.mxu0 %v916
        %2032 = vmatpush1.msra.mxu0 %v915
        %2033 = vmatprep.subr.mxu0 %v924
        %2034 = vmatpush1.msra.mxu0 %v923
        %2035 = vmatprep.subr.mxu0 %v932
        %2036 = vmatpush1.msra.mxu0 %v931
        %2037 = vmatprep.subr.mxu0 %v940
        %2038 = vmatpush1.msra.mxu0 %v939
        %2039 = vmatprep.subr.mxu0 %v948
        %2040 = vmatpush1.msra.mxu0 %v947
        %2041 = vmatprep.mubr.f32.mxu0 %v172
        %2042 = vmatmul.mubr.f32.gmra.mrb[0].mxu0 %v171
        %v2043 = vpop.f32.mrb[0].mxu0
        %v2044 = vadd.f32 %v1967, %v2043
        %v2045 = vpop.f32.mrb[0].mxu0
        %v2046 = vadd.f32 %v1969, %v2045
        %2047 = vmatprep.mubr.f32.mxu0 %v180
        %2048 = vmatmul.mubr.f32.gmra.mrb[0].mxu0 %v179
        %v2049 = vpop.f32.mrb[0].mxu0
        %v2050 = vadd.f32 %v1973, %v2049
        %v2051 = vpop.f32.mrb[0].mxu0
        %v2052 = vadd.f32 %v1975, %v2051
        %2053 = vdwg.mxu0
        %2054 = vmatprep.subr.mxu0 %v956
        %2055 = vmatpush1.msra.mxu0 %v955
        %2056 = vmatprep.subr.mxu0 %v964
        %2057 = vmatpush1.msra.mxu0 %v963
        %2058 = vmatprep.subr.mxu0 %v972
        %2059 = vmatpush1.msra.mxu0 %v971
        %2060 = vmatprep.subr.mxu0 %v980
        %2061 = vmatpush1.msra.mxu0 %v979
        %2062 = vmatprep.subr.mxu0 %v988
        %2063 = vmatpush1.msra.mxu0 %v987
        %2064 = vmatprep.subr.mxu0 %v996
        %2065 = vmatpush1.msra.mxu0 %v995
        %2066 = vmatprep.subr.mxu0 %v1004
        %2067 = vmatpush1.msra.mxu0 %v1003
        %2068 = vmatprep.subr.mxu0 %v1012
        %2069 = vmatpush1.msra.mxu0 %v1011
        %2070 = vmatprep.subr.mxu0 %v1020
        %2071 = vmatpush1.msra.mxu0 %v1019
        %2072 = vmatprep.subr.mxu0 %v1028
        %2073 = vmatpush1.msra.mxu0 %v1027
        %2074 = vmatprep.subr.mxu0 %v1036
        %2075 = vmatpush1.msra.mxu0 %v1035
        %2076 = vmatprep.subr.mxu0 %v1044
        %2077 = vmatpush1.msra.mxu0 %v1043
        %2078 = vmatprep.subr.mxu0 %v1052
        %2079 = vmatpush1.msra.mxu0 %v1051
        %2080 = vmatprep.subr.mxu0 %v1060
        %2081 = vmatpush1.msra.mxu0 %v1059
        %2082 = vmatprep.subr.mxu0 %v1068
        %2083 = vmatpush1.msra.mxu0 %v1067
        %2084 = vmatprep.subr.mxu0 %v1076
        %2085 = vmatpush1.msra.mxu0 %v1075
        %2086 = vmatprep.subr.mxu0 %v1084
        %2087 = vmatpush1.msra.mxu0 %v1083
        %2088 = vmatprep.subr.mxu0 %v1092
        %2089 = vmatpush1.msra.mxu0 %v1091
        %2090 = vmatprep.subr.mxu0 %v1100
        %2091 = vmatpush1.msra.mxu0 %v1099
        %2092 = vmatprep.subr.mxu0 %v1108
        %2093 = vmatpush1.msra.mxu0 %v1107
        %2094 = vmatprep.subr.mxu0 %v1116
        %2095 = vmatpush1.msra.mxu0 %v1115
        %2096 = vmatprep.subr.mxu0 %v1124
        %2097 = vmatpush1.msra.mxu0 %v1123
        %2098 = vmatprep.subr.mxu0 %v1132
        %2099 = vmatpush1.msra.mxu0 %v1131
        %2100 = vmatprep.subr.mxu0 %v1140
        %2101 = vmatpush1.msra.mxu0 %v1139
        %2102 = vmatprep.subr.mxu0 %v1148
        %2103 = vmatpush1.msra.mxu0 %v1147
        %2104 = vmatprep.subr.mxu0 %v1156
        %2105 = vmatpush1.msra.mxu0 %v1155
        %2106 = vmatprep.subr.mxu0 %v1164
        %2107 = vmatpush1.msra.mxu0 %v1163
        %2108 = vmatprep.subr.mxu0 %v1172
        %2109 = vmatpush1.msra.mxu0 %v1171
        %2110 = vmatprep.subr.mxu0 %v1180
        %2111 = vmatpush1.msra.mxu0 %v1179
        %2112 = vmatprep.subr.mxu0 %v1188
        %2113 = vmatpush1.msra.mxu0 %v1187
        %2114 = vmatprep.subr.mxu0 %v1196
        %2115 = vmatpush1.msra.mxu0 %v1195
        %2116 = vmatprep.subr.mxu0 %v1204
        %2117 = vmatpush1.msra.mxu0 %v1203
        %2118 = vmatprep.mubr.f32.mxu0 %v174
        %2119 = vmatmul.mubr.f32.gmra.mrb[0].mxu0 %v173
        %v2120 = vpop.f32.mrb[0].mxu0
        %v2121 = vadd.f32 %v2044, %v2120
        %v2122 = vpop.f32.mrb[0].mxu0
        %v2123 = vadd.f32 %v2046, %v2122
        %2124 = vmatprep.mubr.f32.mxu0 %v182
        %2125 = vmatmul.mubr.f32.gmra.mrb[0].mxu0 %v181
        %v2126 = vpop.f32.mrb[0].mxu0
        %v2127 = vadd.f32 %v2050, %v2126
        %v2128 = vpop.f32.mrb[0].mxu0
        %v2129 = vadd.f32 %v2052, %v2128
        %2130 = vdwg.mxu0
        %2131 = vmatprep.subr.mxu0 %v190
        %2132 = vmatpush1.msra.mxu0 %v189
        %2133 = vmatprep.subr.mxu0 %v198
        %2134 = vmatpush1.msra.mxu0 %v197
        %2135 = vmatprep.subr.mxu0 %v206
        %2136 = vmatpush1.msra.mxu0 %v205
        %2137 = vmatprep.subr.mxu0 %v214
        %2138 = vmatpush1.msra.mxu0 %v213
        %2139 = vmatprep.subr.mxu0 %v222
        %2140 = vmatpush1.msra.mxu0 %v221
        %2141 = vmatprep.subr.mxu0 %v230
        %2142 = vmatpush1.msra.mxu0 %v229
        %2143 = vmatprep.subr.mxu0 %v238
        %2144 = vmatpush1.msra.mxu0 %v237
        %2145 = vmatprep.subr.mxu0 %v246
        %2146 = vmatpush1.msra.mxu0 %v245
        %2147 = vmatprep.subr.mxu0 %v254
        %2148 = vmatpush1.msra.mxu0 %v253
        %2149 = vmatprep.subr.mxu0 %v262
        %2150 = vmatpush1.msra.mxu0 %v261
        %2151 = vmatprep.subr.mxu0 %v270
        %2152 = vmatpush1.msra.mxu0 %v269
        %2153 = vmatprep.subr.mxu0 %v278
        %2154 = vmatpush1.msra.mxu0 %v277
        %2155 = vmatprep.subr.mxu0 %v286
        %2156 = vmatpush1.msra.mxu0 %v285
        %2157 = vmatprep.subr.mxu0 %v294
        %2158 = vmatpush1.msra.mxu0 %v293
        %2159 = vmatprep.subr.mxu0 %v302
        %2160 = vmatpush1.msra.mxu0 %v301
        %2161 = vmatprep.subr.mxu0 %v310
        %2162 = vmatpush1.msra.mxu0 %v309
        %2163 = vmatprep.subr.mxu0 %v318
        %2164 = vmatpush1.msra.mxu0 %v317
        %2165 = vmatprep.subr.mxu0 %v326
        %2166 = vmatpush1.msra.mxu0 %v325
        %2167 = vmatprep.subr.mxu0 %v334
        %2168 = vmatpush1.msra.mxu0 %v333
        %2169 = vmatprep.subr.mxu0 %v342
        %2170 = vmatpush1.msra.mxu0 %v341
        %2171 = vmatprep.subr.mxu0 %v350
        %2172 = vmatpush1.msra.mxu0 %v349
        %2173 = vmatprep.subr.mxu0 %v358
        %2174 = vmatpush1.msra.mxu0 %v357
        %2175 = vmatprep.subr.mxu0 %v366
        %2176 = vmatpush1.msra.mxu0 %v365
        %2177 = vmatprep.subr.mxu0 %v374
        %2178 = vmatpush1.msra.mxu0 %v373
        %2179 = vmatprep.subr.mxu0 %v382
        %2180 = vmatpush1.msra.mxu0 %v381
        %2181 = vmatprep.subr.mxu0 %v390
        %2182 = vmatpush1.msra.mxu0 %v389
        %2183 = vmatprep.subr.mxu0 %v398
        %2184 = vmatpush1.msra.mxu0 %v397
        %2185 = vmatprep.subr.mxu0 %v406
        %2186 = vmatpush1.msra.mxu0 %v405
        %2187 = vmatprep.subr.mxu0 %v414
        %2188 = vmatpush1.msra.mxu0 %v413
        %2189 = vmatprep.subr.mxu0 %v422
        %2190 = vmatpush1.msra.mxu0 %v421
        %2191 = vmatprep.subr.mxu0 %v430
        %2192 = vmatpush1.msra.mxu0 %v429
        %2193 = vmatprep.subr.mxu0 %v438
        %2194 = vmatpush1.msra.mxu0 %v437
        %2195 = vmatprep.mubr.f32.mxu0 %v168
        %2196 = vmatmul.mubr.f32.gmra.mrb[0].mxu0 %v167
        %v2197 = vpop.f32.mrb[0].mxu0
        %v2198 = vadd.f32 0.0, %v2197
        %v2199 = vpop.f32.mrb[0].mxu0
        %v2200 = vadd.f32 0.0, %v2199
        %2201 = vmatprep.mubr.f32.mxu0 %v176
        %2202 = vmatmul.mubr.f32.gmra.mrb[0].mxu0 %v175
        %v2203 = vpop.f32.mrb[0].mxu0
        %v2204 = vadd.f32 0.0, %v2203
        %v2205 = vpop.f32.mrb[0].mxu0
        %v2206 = vadd.f32 0.0, %v2205
        %2207 = vdwg.mxu0
        %2208 = vmatprep.subr.mxu0 %v446
        %2209 = vmatpush1.msra.mxu0 %v445
        %2210 = vmatprep.subr.mxu0 %v454
        %2211 = vmatpush1.msra.mxu0 %v453
        %2212 = vmatprep.subr.mxu0 %v462
        %2213 = vmatpush1.msra.mxu0 %v461
        %2214 = vmatprep.subr.mxu0 %v470
        %2215 = vmatpush1.msra.mxu0 %v469
        %2216 = vmatprep.subr.mxu0 %v478
        %2217 = vmatpush1.msra.mxu0 %v477
        %2218 = vmatprep.subr.mxu0 %v486
        %2219 = vmatpush1.msra.mxu0 %v485
        %2220 = vmatprep.subr.mxu0 %v494
        %2221 = vmatpush1.msra.mxu0 %v493
        %2222 = vmatprep.subr.mxu0 %v502
        %2223 = vmatpush1.msra.mxu0 %v501
        %2224 = vmatprep.subr.mxu0 %v510
        %2225 = vmatpush1.msra.mxu0 %v509
        %2226 = vmatprep.subr.mxu0 %v518
        %2227 = vmatpush1.msra.mxu0 %v517
        %2228 = vmatprep.subr.mxu0 %v526
        %2229 = vmatpush1.msra.mxu0 %v525
        %2230 = vmatprep.subr.mxu0 %v534
        %2231 = vmatpush1.msra.mxu0 %v533
        %2232 = vmatprep.subr.mxu0 %v542
        %2233 = vmatpush1.msra.mxu0 %v541
        %2234 = vmatprep.subr.mxu0 %v550
        %2235 = vmatpush1.msra.mxu0 %v549
        %2236 = vmatprep.subr.mxu0 %v558
        %2237 = vmatpush1.msra.mxu0 %v557
        %2238 = vmatprep.subr.mxu0 %v566
        %2239 = vmatpush1.msra.mxu0 %v565
        %2240 = vmatprep.subr.mxu0 %v574
        %2241 = vmatpush1.msra.mxu0 %v573
        %2242 = vmatprep.subr.mxu0 %v582
        %2243 = vmatpush1.msra.mxu0 %v581
        %2244 = vmatprep.subr.mxu0 %v590
        %2245 = vmatpush1.msra.mxu0 %v589
        %2246 = vmatprep.subr.mxu0 %v598
        %2247 = vmatpush1.msra.mxu0 %v597
        %2248 = vmatprep.subr.mxu0 %v606
        %2249 = vmatpush1.msra.mxu0 %v605
        %2250 = vmatprep.subr.mxu0 %v614
        %2251 = vmatpush1.msra.mxu0 %v613
        %2252 = vmatprep.subr.mxu0 %v622
        %2253 = vmatpush1.msra.mxu0 %v621
        %2254 = vmatprep.subr.mxu0 %v630
        %2255 = vmatpush1.msra.mxu0 %v629
        %2256 = vmatprep.subr.mxu0 %v638
        %2257 = vmatpush1.msra.mxu0 %v637
        %2258 = vmatprep.subr.mxu0 %v646
        %2259 = vmatpush1.msra.mxu0 %v645
        %2260 = vmatprep.subr.mxu0 %v654
        %2261 = vmatpush1.msra.mxu0 %v653
        %2262 = vmatprep.subr.mxu0 %v662
        %2263 = vmatpush1.msra.mxu0 %v661
        %2264 = vmatprep.subr.mxu0 %v670
        %2265 = vmatpush1.msra.mxu0 %v669
        %2266 = vmatprep.subr.mxu0 %v678
        %2267 = vmatpush1.msra.mxu0 %v677
        %2268 = vmatprep.subr.mxu0 %v686
        %2269 = vmatpush1.msra.mxu0 %v685
        %2270 = vmatprep.subr.mxu0 %v694
        %2271 = vmatpush1.msra.mxu0 %v693
        %2272 = vmatprep.mubr.f32.mxu0 %v170
        %2273 = vmatmul.mubr.f32.gmra.mrb[0].mxu0 %v169
        %v2274 = vpop.f32.mrb[0].mxu0
        %v2275 = vadd.f32 %v2198, %v2274
        %v2276 = vpop.f32.mrb[0].mxu0
        %v2277 = vadd.f32 %v2200, %v2276
        %2278 = vmatprep.mubr.f32.mxu0 %v178
        %2279 = vmatmul.mubr.f32.gmra.mrb[0].mxu0 %v177
        %v2280 = vpop.f32.mrb[0].mxu0
        %v2281 = vadd.f32 %v2204, %v2280
        %v2282 = vpop.f32.mrb[0].mxu0
        %v2283 = vadd.f32 %v2206, %v2282
        %2284 = vdwg.mxu0
        %2285 = vmatprep.subr.mxu0 %v702
        %2286 = vmatpush1.msra.mxu0 %v701
        %2287 = vmatprep.subr.mxu0 %v710
        %2288 = vmatpush1.msra.mxu0 %v709
        %2289 = vmatprep.subr.mxu0 %v718
        %2290 = vmatpush1.msra.mxu0 %v717
        %2291 = vmatprep.subr.mxu0 %v726
        %2292 = vmatpush1.msra.mxu0 %v725
        %2293 = vmatprep.subr.mxu0 %v734
        %2294 = vmatpush1.msra.mxu0 %v733
        %2295 = vmatprep.subr.mxu0 %v742
        %2296 = vmatpush1.msra.mxu0 %v741
        %2297 = vmatprep.subr.mxu0 %v750
        %2298 = vmatpush1.msra.mxu0 %v749
        %2299 = vmatprep.subr.mxu0 %v758
        %2300 = vmatpush1.msra.mxu0 %v757
        %2301 = vmatprep.subr.mxu0 %v766
        %2302 = vmatpush1.msra.mxu0 %v765
        %2303 = vmatprep.subr.mxu0 %v774
        %2304 = vmatpush1.msra.mxu0 %v773
        %2305 = vmatprep.subr.mxu0 %v782
        %2306 = vmatpush1.msra.mxu0 %v781
        %2307 = vmatprep.subr.mxu0 %v790
        %2308 = vmatpush1.msra.mxu0 %v789
        %2309 = vmatprep.subr.mxu0 %v798
        %2310 = vmatpush1.msra.mxu0 %v797
        %2311 = vmatprep.subr.mxu0 %v806
        %2312 = vmatpush1.msra.mxu0 %v805
        %2313 = vmatprep.subr.mxu0 %v814
        %2314 = vmatpush1.msra.mxu0 %v813
        %2315 = vmatprep.subr.mxu0 %v822
        %2316 = vmatpush1.msra.mxu0 %v821
        %2317 = vmatprep.subr.mxu0 %v830
        %2318 = vmatpush1.msra.mxu0 %v829
        %2319 = vmatprep.subr.mxu0 %v838
        %2320 = vmatpush1.msra.mxu0 %v837
        %2321 = vmatprep.subr.mxu0 %v846
        %2322 = vmatpush1.msra.mxu0 %v845
        %2323 = vmatprep.subr.mxu0 %v854
        %2324 = vmatpush1.msra.mxu0 %v853
        %2325 = vmatprep.subr.mxu0 %v862
        %2326 = vmatpush1.msra.mxu0 %v861
        %2327 = vmatprep.subr.mxu0 %v870
        %2328 = vmatpush1.msra.mxu0 %v869
        %2329 = vmatprep.subr.mxu0 %v878
        %2330 = vmatpush1.msra.mxu0 %v877
        %2331 = vmatprep.subr.mxu0 %v886
        %2332 = vmatpush1.msra.mxu0 %v885
        %2333 = vmatprep.subr.mxu0 %v894
        %2334 = vmatpush1.msra.mxu0 %v893
        %2335 = vmatprep.subr.mxu0 %v902
        %2336 = vmatpush1.msra.mxu0 %v901
        %2337 = vmatprep.subr.mxu0 %v910
        %2338 = vmatpush1.msra.mxu0 %v909
        %2339 = vmatprep.subr.mxu0 %v918
        %2340 = vmatpush1.msra.mxu0 %v917
        %2341 = vmatprep.subr.mxu0 %v926
        %2342 = vmatpush1.msra.mxu0 %v925
        %2343 = vmatprep.subr.mxu0 %v934
        %2344 = vmatpush1.msra.mxu0 %v933
        %2345 = vmatprep.subr.mxu0 %v942
        %2346 = vmatpush1.msra.mxu0 %v941
        %2347 = vmatprep.subr.mxu0 %v950
        %2348 = vmatpush1.msra.mxu0 %v949
        %2349 = vmatprep.mubr.f32.mxu0 %v172
        %2350 = vmatmul.mubr.f32.gmra.mrb[0].mxu0 %v171
        %v2351 = vpop.f32.mrb[0].mxu0
        %v2352 = vadd.f32 %v2275, %v2351
        %v2353 = vpop.f32.mrb[0].mxu0
        %v2354 = vadd.f32 %v2277, %v2353
        %2355 = vmatprep.mubr.f32.mxu0 %v180
        %2356 = vmatmul.mubr.f32.gmra.mrb[0].mxu0 %v179
        %v2357 = vpop.f32.mrb[0].mxu0
        %v2358 = vadd.f32 %v2281, %v2357
        %v2359 = vpop.f32.mrb[0].mxu0
        %v2360 = vadd.f32 %v2283, %v2359
        %2361 = vdwg.mxu0
        %2362 = vmatprep.subr.mxu0 %v958
        %2363 = vmatpush1.msra.mxu0 %v957
        %2364 = vmatprep.subr.mxu0 %v966
        %2365 = vmatpush1.msra.mxu0 %v965
        %2366 = vmatprep.subr.mxu0 %v974
        %2367 = vmatpush1.msra.mxu0 %v973
        %2368 = vmatprep.subr.mxu0 %v982
        %2369 = vmatpush1.msra.mxu0 %v981
        %2370 = vmatprep.subr.mxu0 %v990
        %2371 = vmatpush1.msra.mxu0 %v989
        %2372 = vmatprep.subr.mxu0 %v998
        %2373 = vmatpush1.msra.mxu0 %v997
        %2374 = vmatprep.subr.mxu0 %v1006
        %2375 = vmatpush1.msra.mxu0 %v1005
        %2376 = vmatprep.subr.mxu0 %v1014
        %2377 = vmatpush1.msra.mxu0 %v1013
        %2378 = vmatprep.subr.mxu0 %v1022
        %2379 = vmatpush1.msra.mxu0 %v1021
        %2380 = vmatprep.subr.mxu0 %v1030
        %2381 = vmatpush1.msra.mxu0 %v1029
        %2382 = vmatprep.subr.mxu0 %v1038
        %2383 = vmatpush1.msra.mxu0 %v1037
        %2384 = vmatprep.subr.mxu0 %v1046
        %2385 = vmatpush1.msra.mxu0 %v1045
        %2386 = vmatprep.subr.mxu0 %v1054
        %2387 = vmatpush1.msra.mxu0 %v1053
        %2388 = vmatprep.subr.mxu0 %v1062
        %2389 = vmatpush1.msra.mxu0 %v1061
        %2390 = vmatprep.subr.mxu0 %v1070
        %2391 = vmatpush1.msra.mxu0 %v1069
        %2392 = vmatprep.subr.mxu0 %v1078
        %2393 = vmatpush1.msra.mxu0 %v1077
        %2394 = vmatprep.subr.mxu0 %v1086
        %2395 = vmatpush1.msra.mxu0 %v1085
        %2396 = vmatprep.subr.mxu0 %v1094
        %2397 = vmatpush1.msra.mxu0 %v1093
        %2398 = vmatprep.subr.mxu0 %v1102
        %2399 = vmatpush1.msra.mxu0 %v1101
        %2400 = vmatprep.subr.mxu0 %v1110
        %2401 = vmatpush1.msra.mxu0 %v1109
        %2402 = vmatprep.subr.mxu0 %v1118
        %2403 = vmatpush1.msra.mxu0 %v1117
        %2404 = vmatprep.subr.mxu0 %v1126
        %2405 = vmatpush1.msra.mxu0 %v1125
        %2406 = vmatprep.subr.mxu0 %v1134
        %2407 = vmatpush1.msra.mxu0 %v1133
        %2408 = vmatprep.subr.mxu0 %v1142
        %2409 = vmatpush1.msra.mxu0 %v1141
        %2410 = vmatprep.subr.mxu0 %v1150
        %2411 = vmatpush1.msra.mxu0 %v1149
        %2412 = vmatprep.subr.mxu0 %v1158
        %2413 = vmatpush1.msra.mxu0 %v1157
        %2414 = vmatprep.subr.mxu0 %v1166
        %2415 = vmatpush1.msra.mxu0 %v1165
        %2416 = vmatprep.subr.mxu0 %v1174
        %2417 = vmatpush1.msra.mxu0 %v1173
        %2418 = vmatprep.subr.mxu0 %v1182
        %2419 = vmatpush1.msra.mxu0 %v1181
        %2420 = vmatprep.subr.mxu0 %v1190
        %2421 = vmatpush1.msra.mxu0 %v1189
        %2422 = vmatprep.subr.mxu0 %v1198
        %2423 = vmatpush1.msra.mxu0 %v1197
        %2424 = vmatprep.subr.mxu0 %v1206
        %2425 = vmatpush1.msra.mxu0 %v1205
        %2426 = vmatprep.mubr.f32.mxu0 %v174
        %2427 = vmatmul.mubr.f32.gmra.mrb[0].mxu0 %v173
        %v2428 = vpop.f32.mrb[0].mxu0
        %v2429 = vadd.f32 %v2352, %v2428
        %v2430 = vpop.f32.mrb[0].mxu0
        %v2431 = vadd.f32 %v2354, %v2430
        %2432 = vmatprep.mubr.f32.mxu0 %v182
        %2433 = vmatmul.mubr.f32.gmra.mrb[0].mxu0 %v181
        %v2434 = vpop.f32.mrb[0].mxu0
        %v2435 = vadd.f32 %v2358, %v2434
        %v2436 = vpop.f32.mrb[0].mxu0
        %v2437 = vadd.f32 %v2360, %v2436
        %2438 = vdwg.mxu0
        %v2439 = vmul.f32 %v1505, %v1505
        %v2440 = vmul.f32 %v1507, %v1507
        %v2441 = vmul.f32 %v1813, %v1813
        %v2442 = vmul.f32 %v1815, %v1815
        %v2443 = vmul.f32 %v1511, %v1511
        %v2444 = vmul.f32 %v1513, %v1513
        %v2445 = vmul.f32 %v1819, %v1819
        %v2446 = vmul.f32 %v1821, %v1821
        %v2447 = vmul.f32 %v2121, %v2121
        %v2448 = vmul.f32 %v2123, %v2123
        %v2449 = vmul.f32 %v2429, %v2429
        %v2450 = vmul.f32 %v2431, %v2431
        %v2451 = vmul.f32 %v2127, %v2127
        %v2452 = vmul.f32 %v2129, %v2129
        %v2453 = vmul.f32 %v2435, %v2435
        %v2454 = vmul.f32 %v2437, %v2437
        %v2455 = vadd.f32 %v2439, %v2447
        %v2456 = vadd.f32 %v2440, %v2448
        %v2457 = vadd.f32 %v2441, %v2449
        %v2458 = vadd.f32 %v2442, %v2450
        %v2459 = vadd.f32 %v2443, %v2451
        %v2460 = vadd.f32 %v2444, %v2452
        %v2461 = vadd.f32 %v2445, %v2453
        %v2462 = vadd.f32 %v2446, %v2454
        %v2463 = vmax.f32 %v2455, 1e-08
        %v2464 = vmax.f32 %v2456, 1e-08
        %v2465 = vmax.f32 %v2457, 1e-08
        %v2466 = vmax.f32 %v2458, 1e-08
        %v2467 = vmax.f32 %v2459, 1e-08
        %v2468 = vmax.f32 %v2460, 1e-08
        %v2469 = vmax.f32 %v2461, 1e-08
        %v2470 = vmax.f32 %v2462, 1e-08
        %v2471 = vlog2.pop %v2463
        %v2472 = vmul.f32 %v2471, 0.6931472
        %v2473 = vlog2.pop %v2464
        %v2474 = vmul.f32 %v2473, 0.6931472
        %v2475 = vlog2.pop %v2465
        %v2476 = vmul.f32 %v2475, 0.6931472
        %v2477 = vlog2.pop %v2466
        %v2478 = vmul.f32 %v2477, 0.6931472
        %v2479 = vlog2.pop %v2467
        %v2480 = vmul.f32 %v2479, 0.6931472
        %v2481 = vlog2.pop %v2468
        %v2482 = vmul.f32 %v2481, 0.6931472
        %v2483 = vlog2.pop %v2469
        %v2484 = vmul.f32 %v2483, 0.6931472
        %v2485 = vlog2.pop %v2470
        %v2486 = vmul.f32 %v2485, 0.6931472
        %v2487 = vmul.f32 %v2472, 0.4342945
        %v2488 = vmul.f32 %v2474, 0.4342945
        %v2489 = vmul.f32 %v2476, 0.4342945
        %v2490 = vmul.f32 %v2478, 0.4342945
        %v2491 = vmul.f32 %v2480, 0.4342945
        %v2492 = vmul.f32 %v2482, 0.4342945
        %v2493 = vmul.f32 %v2484, 0.4342945
        %v2494 = vmul.f32 %v2486, 0.4342945
        %v2495 = vmul.f32 %v2487, 0.5
        %v2496 = vmul.f32 %v2488, 0.5
        %v2497 = vmul.f32 %v2489, 0.5
        %v2498 = vmul.f32 %v2490, 0.5
        %v2499 = vmul.f32 %v2491, 0.5
        %v2500 = vmul.f32 %v2492, 0.5
        %v2501 = vmul.f32 %v2493, 0.5
        %v2502 = vmul.f32 %v2494, 0.5
        %2503 = vst [vmem:[%s165] sm:$0xff] %v2495
        %2504 = vst [vmem:[%s165 + $0x8] sm:$0xff] %v2496
        %2505 = vst [vmem:[%s165 + $0x10] sm:$0xff] %v2497
        %2506 = vst [vmem:[%s165 + $0x18] sm:$0xff] %v2498
        %2507 = vst [vmem:[%s165 + $0x20] sm:$0xff] %v2499
        %2508 = vst [vmem:[%s165 + $0x28] sm:$0xff] %v2500
        %2509 = vst [vmem:[%s165 + $0x30] sm:$0xff] %v2501
        %2510 = vst [vmem:[%s165 + $0x38] sm:$0xff] %v2502
        %s2511 = smul.u32 2, %s14
        %p2512 = scmp.lt.s32.totalorder %s2511, 3
        %s2513 = scalar_select %p2512, %s2511, 3
        %s2514 = smul.addr %s2513, 4
        %s2515 = smul.addr %s2514, 8
        %s2516 = scalar_lea.vmem %s2, %s2515
        // Predicated region
        $region33: #{_stft_impl.1} parent=27 // pred_check
          %p2517 = pneg %p79
        $region34: #{_stft_impl.1} parent=27 // pred_check_branch
          %2519 = sbr.rel (%p2517) target = $region36
        $region35: #{_stft_impl.1} parent=27 // pred_region
          %s2520 = smul.u32 2, %s14
        $region36: #{_stft_impl.1} parent=27 // pred_fallthru
          _
      $region28: #{_stft_impl.1} parent=5 // pred_fallthru
        _
      %p2521 = scmp.le.s32.totalorder 2, %s9
      // Predicated region
      $region37: #{_stft_impl.1} parent=5 // pred_check
        %p2522 = pneg %p2521
      $region38: #{_stft_impl.1} parent=5 // pred_check_branch
        %2524 = sbr.rel (%p2522) target = $region40
      $region39: #{_stft_impl.1} parent=5 // pred_region
        %s2525 = ssub.s32 %s9, 2
        // Predicated region
        $region41: #{_stft_impl.1} parent=39 // pred_check
          %p2526 = pneg %p85
        $region42: #{_stft_impl.1} parent=39 // pred_check_branch
          %2528 = sbr.rel (%p2526) target = $region44
        $region43: #{_stft_impl.1} parent=39 // pred_region
          %s2529 = smul.u32 2, %s15
          %p2530 = scmp.lt.s32.totalorder %s2529, 3
          %s2531 = scalar_select %p2530, %s2529, 3
          %s2532 = smul.addr %s2531, 4
          %s2533 = smul.addr %s2532, 8
          %s2534 = scalar_lea.vmem %s2, %s2533
        $region44: #{_stft_impl.1} parent=39 // pred_fallthru
          _
      $region40: #{_stft_impl.1} parent=5 // pred_fallthru
        _
    $region6: #{_stft_impl.1} parent=1 // loop_footer
      %s13 = sadd.s32 1, %s9
    $region7: #{_stft_impl.1} parent=1 // loop_footer_branch
      %8 = sbr.rel target = $region3
    $region8: #{_stft_impl.1} parent=1 // loop_exit
      _
    %2535 = vsyncpa [#allocation3], 1
    %s2536 = scalar_lea.sflag [#allocation3], 1
    %2537 = vsyncpa %s2536, 1

</llo_original>
